<compile_context>
chip_gen: v6e
topology: v6e:2x2x1
jax: 0.10.0
libtpu: 0.0.40
codegen_flags: <defaults>
</compile_context>

<pallas_src>
import numpy as np
import jax
import jax.numpy as jnp
from jax.experimental import pallas as pl
from jax.experimental.pallas import tpu as pltpu

NUM_HEADS = 4
HIDDEN = 32
D_V = HIDDEN // NUM_HEADS


def _mha_kernel(x_ref, wqkv_ref, bqkv_ref, wo_ref, bo_ref, out_ref, attn_ref):
    # x_ref:    (3*B, S, H)   rows 0..B-1 = query, B..2B-1 = key, 2B..3B-1 = value
    # wqkv_ref: (3*B, H, H)   per-row projection weight (W_q already scaled by 1/sqrt(d_v))
    # bqkv_ref: (3*B, 1, H)
    # wo_ref:   (H, H), bo_ref: (1, H)
    # out_ref:  (B, S, H), attn_ref: (NUM_HEADS, B, S, S)
    G, S, H = x_ref.shape
    B = G // 3

    # Fused Q/K/V projection: one batched MXU contraction + one bias add for
    # all three projections over every batch element.
    qkv = jnp.einsum('gsh,gho->gso', x_ref[...], wqkv_ref[...],
                     preferred_element_type=jnp.float32) + bqkv_ref[...]
    q = qkv[0 * B:1 * B]          # (B, S, H); 1/sqrt(d_v) already folded into W_q
    k = qkv[1 * B:2 * B]
    v = qkv[2 * B:3 * B]

    # Hoisted once: batched copy of W_o so the per-head output projection is a
    # standard batched 3-D dot (no rank-3 x rank-2 dots, no concat of heads).
    wo_b = jnp.broadcast_to(wo_ref[...], (B, H, H))

    acc = jnp.zeros((B, S, H), jnp.float32)
    for h in range(NUM_HEADS):                     # static unroll, NUM_HEADS = 4
        lo = h * D_V
        qh = q[:, :, lo:lo + D_V]                  # (B, S, d_v)
        kh = k[:, :, lo:lo + D_V]
        vh = v[:, :, lo:lo + D_V]

        # scores: contract the last dims directly (no explicit kh.T transpose)
        s = jnp.einsum('bqd,bkd->bqk', qh, kh,
                       preferred_element_type=jnp.float32)        # (B, S, S)
        s = s - jnp.max(s, axis=-1, keepdims=True)
        e = jnp.exp(s)
        # softmax denominator on the EUP instead of a VALU divide
        p = e * pl.reciprocal(jnp.sum(e, axis=-1, keepdims=True), approx=True)
        attn_ref[h] = p                                            # (B, S, S)

        head = jnp.einsum('bqk,bkd->bqd', p, vh,
                          preferred_element_type=jnp.float32)      # (B, S, d_v)
        # output projection as a sum over heads: head_h @ W_o[h*d_v:(h+1)*d_v, :]
        acc = acc + jnp.einsum('bqd,bdo->bqo', head, wo_b[:, lo:lo + D_V, :],
                               preferred_element_type=jnp.float32)  # (B, S, H)

    out_ref[...] = acc + bo_ref[...]


def multi_head_attention(query, key, value, params):
    """Returns (output (B,S,H), [attention_weights_h (B,S,S) for h in heads])."""
    B, S, H = query.shape
    wq, bq, wk, bk, wv, bv, wo, bo = params

    # Fold the 1/sqrt(d_v) attention scale into the Q projection (trace-time, free).
    scale = jnp.float32(1.0 / np.sqrt(D_V))
    w_qkv = jnp.stack([wq * scale, wk, wv])                        # (3, H, H)
    b_qkv = jnp.stack([bq * scale, bk, bv])                        # (3, 1, H)
    # Replicate per batch element so the in-kernel projection is a single batched
    # dot with no in-kernel reshapes (few KB of extra weight bytes, negligible).
    w_g = jnp.broadcast_to(w_qkv[:, None], (3, B, H, H)).reshape(3 * B, H, H)
    b_g = jnp.broadcast_to(b_qkv[:, None], (3, B, 1, H)).reshape(3 * B, 1, H)
    x_g = jnp.stack([query, key, value]).reshape(3 * B, S, H)      # (3B, S, H)

    in_specs = [
        pl.BlockSpec((3 * B, S, H), lambda i: (0, 0, 0)),
        pl.BlockSpec((3 * B, H, H), lambda i: (0, 0, 0)),
        pl.BlockSpec((3 * B, 1, H), lambda i: (0, 0, 0)),
        pl.BlockSpec((H, H), lambda i: (0, 0)),
        pl.BlockSpec((1, H), lambda i: (0, 0)),
    ]
    out_specs = (
        pl.BlockSpec((B, S, H), lambda i: (0, 0, 0)),
        pl.BlockSpec((NUM_HEADS, B, S, S), lambda i: (0, 0, 0, 0)),
    )

    out, attn = pl.pallas_call(
        _mha_kernel,
        out_shape=(jax.ShapeDtypeStruct((B, S, H), jnp.float32),
                   jax.ShapeDtypeStruct((NUM_HEADS, B, S, S), jnp.float32)),
        grid=(1,),          # whole (tiny) problem in one step: grid over B was pure overhead
        in_specs=in_specs,
        out_specs=out_specs,
        compiler_params=pltpu.CompilerParams(dimension_semantics=("arbitrary",)),
    )(x_g, w_g, b_g, wo, bo)

    attention_weights = [attn[h] for h in range(NUM_HEADS)]
    return out, attention_weights


def _reference(query, key, value, params):
    # Pure-JAX reference mirroring the torch forward (unscaled weights, explicit /sqrt(d_k)).
    wq, bq, wk, bk, wv, bv, wo, bo = params
    Q = query @ wq + bq
    K = key @ wk + bk
    V = value @ wv + bv
    heads, attns = [], []
    for h in range(NUM_HEADS):
        sl = slice(h * D_V, (h + 1) * D_V)
        qh, kh, vh = Q[..., sl], K[..., sl], V[..., sl]
        s = jnp.einsum('bqd,bkd->bqk', qh, kh) / np.float32(np.sqrt(D_V))
        p = jax.nn.softmax(s, axis=-1)
        attns.append(p)
        heads.append(jnp.einsum('bqk,bkd->bqd', p, vh))
    concat = jnp.concatenate(heads, axis=-1)
    return concat @ wo + bo, attns


def _init_linear(key, fan_in, fan_out):
    # Deterministic init mimicking torch.nn.Linear default (uniform +-1/sqrt(fan_in)).
    k_w, k_b = jax.random.split(key)
    bound = 1.0 / np.sqrt(fan_in)
    w = jax.random.uniform(k_w, (fan_in, fan_out), jnp.float32, -bound, bound)  # (in, out)
    b = jax.random.uniform(k_b, (1, fan_out), jnp.float32, -bound, bound)
    return w, b


if __name__ == "__main__":
    B, S, H = 2, 8, HIDDEN

    root = jax.random.PRNGKey(0)
    keys = jax.random.split(root, 7)
    wq, bq = _init_linear(keys[0], H, H)
    wk, bk = _init_linear(keys[1], H, H)
    wv, bv = _init_linear(keys[2], H, H)
    wo, bo = _init_linear(keys[3], H, H)
    params = (wq, bq, wk, bk, wv, bv, wo, bo)

    query = jax.random.normal(keys[4], (B, S, H), jnp.float32)
    key_in = jax.random.normal(keys[5], (B, S, H), jnp.float32)
    value = jax.random.normal(keys[6], (B, S, H), jnp.float32)

    out, attn_weights = multi_head_attention(query, key_in, value, params)
    out = jax.block_until_ready(out)
    attn_weights = [jax.block_until_ready(a) for a in attn_weights]

    ref_out, ref_attns = _reference(query, key_in, value, params)
    # Tolerance accounts for the EUP approximate-reciprocal softmax normalization.
    assert np.allclose(np.asarray(out), np.asarray(ref_out), atol=5e-3, rtol=1e-2)
    for a, ra in zip(attn_weights, ref_attns):
        assert np.allclose(np.asarray(a), np.asarray(ra), atol=5e-3, rtol=1e-2)

    print("KERNEL_OK")
</pallas_src>

<mosaic_0001>
module attributes {stable_mosaic.version = 11 : i64} {
  func.func @_mha_kernel(%arg0: i32, %arg1: memref<6x8x32xf32, #tpu.memory_space<vmem>>, %arg2: memref<6x32x32xf32, #tpu.memory_space<vmem>>, %arg3: memref<6x1x32xf32, #tpu.memory_space<vmem>>, %arg4: memref<32x32xf32, #tpu.memory_space<vmem>>, %arg5: memref<1x32xf32, #tpu.memory_space<vmem>>, %arg6: memref<2x8x32xf32, #tpu.memory_space<vmem>>, %arg7: memref<4x2x8x8xf32, #tpu.memory_space<vmem>>) attributes {dimension_semantics = [#tpu.dimension_semantics<arbitrary>], iteration_bounds = array<i64: 1>, scalar_prefetch = 0 : i64, scratch_operands = 0 : i64, tpu.core_type = #tpu.core_type<tc>, window_params = [{pipeline_mode = #tpu.pipeline_mode<synchronous>, transform_indices = @transform_0, window_bounds = array<i64: 6, 8, 32>}, {pipeline_mode = #tpu.pipeline_mode<synchronous>, transform_indices = @transform_1, window_bounds = array<i64: 6, 32, 32>}, {pipeline_mode = #tpu.pipeline_mode<synchronous>, transform_indices = @transform_2, window_bounds = array<i64: 6, 1, 32>}, {pipeline_mode = #tpu.pipeline_mode<synchronous>, transform_indices = @transform_3, window_bounds = array<i64: 32, 32>}, {pipeline_mode = #tpu.pipeline_mode<synchronous>, transform_indices = @transform_4, window_bounds = array<i64: 1, 32>}, {pipeline_mode = #tpu.pipeline_mode<synchronous>, transform_indices = @transform_5, window_bounds = array<i64: 2, 8, 32>}, {pipeline_mode = #tpu.pipeline_mode<synchronous>, transform_indices = @transform_6, window_bounds = array<i64: 4, 2, 8, 8>}]} {
    %c0 = arith.constant 0 : index
    %c0_0 = arith.constant 0 : index
    %c0_1 = arith.constant 0 : index
    %0 = vector.load %arg1[%c0, %c0_0, %c0_1] : memref<6x8x32xf32, #tpu.memory_space<vmem>>, vector<6x8x32xf32>
    %c0_2 = arith.constant 0 : index
    %c0_3 = arith.constant 0 : index
    %c0_4 = arith.constant 0 : index
    %1 = vector.load %arg2[%c0_2, %c0_3, %c0_4] : memref<6x32x32xf32, #tpu.memory_space<vmem>>, vector<6x32x32xf32>
    "tpu.trace_start"() <{level = 10 : i32, message = "gsh,gho->gso"}> : () -> ()
    %cst = arith.constant dense<0.000000e+00> : vector<6x8x32xf32>
    %2 = tpu.matmul %0, %1, %cst {dimension_numbers = #tpu.dot_dimension_numbers<[2], [1], [1], [2], [0, 0, 0, 1, 1, 2], [0], [0]>} : vector<6x8x32xf32>, vector<6x32x32xf32>, vector<6x8x32xf32> -> vector<6x8x32xf32>
    "tpu.trace_stop"() : () -> ()
    %c0_5 = arith.constant 0 : index
    %c0_6 = arith.constant 0 : index
    %c0_7 = arith.constant 0 : index
    %3 = vector.load %arg3[%c0_5, %c0_6, %c0_7] : memref<6x1x32xf32, #tpu.memory_space<vmem>>, vector<6x1x32xf32>
    %4 = vector.broadcast %3 : vector<6x1x32xf32> to vector<6x8x32xf32>
    %5 = arith.addf %2, %4 : vector<6x8x32xf32>
    %6 = vector.extract_strided_slice %5 {offsets = [0, 0, 0], sizes = [2, 8, 32], strides = [1, 1, 1]} : vector<6x8x32xf32> to vector<2x8x32xf32>
    %7 = vector.extract_strided_slice %5 {offsets = [2, 0, 0], sizes = [2, 8, 32], strides = [1, 1, 1]} : vector<6x8x32xf32> to vector<2x8x32xf32>
    %8 = vector.extract_strided_slice %5 {offsets = [4, 0, 0], sizes = [2, 8, 32], strides = [1, 1, 1]} : vector<6x8x32xf32> to vector<2x8x32xf32>
    %c0_8 = arith.constant 0 : index
    %c0_9 = arith.constant 0 : index
    %9 = vector.load %arg4[%c0_8, %c0_9] : memref<32x32xf32, #tpu.memory_space<vmem>>, vector<32x32xf32>
    %10 = vector.shape_cast %9 : vector<32x32xf32> to vector<1x32x32xf32>
    %11 = vector.broadcast %10 : vector<1x32x32xf32> to vector<2x32x32xf32>
    %cst_10 = arith.constant 0.000000e+00 : f32
    %12 = vector.broadcast %cst_10 : f32 to vector<2x8x32xf32>
    %13 = vector.extract_strided_slice %6 {offsets = [0, 0, 0], sizes = [2, 8, 8], strides = [1, 1, 1]} : vector<2x8x32xf32> to vector<2x8x8xf32>
    %14 = vector.extract_strided_slice %7 {offsets = [0, 0, 0], sizes = [2, 8, 8], strides = [1, 1, 1]} : vector<2x8x32xf32> to vector<2x8x8xf32>
    %15 = vector.extract_strided_slice %8 {offsets = [0, 0, 0], sizes = [2, 8, 8], strides = [1, 1, 1]} : vector<2x8x32xf32> to vector<2x8x8xf32>
    "tpu.trace_start"() <{level = 10 : i32, message = "bqd,bkd->bqk"}> : () -> ()
    %cst_11 = arith.constant dense<0.000000e+00> : vector<2x8x8xf32>
    %16 = tpu.matmul %13, %14, %cst_11 {dimension_numbers = #tpu.dot_dimension_numbers<[2], [2], [1], [1], [0, 0, 0, 1, 1, 1], [0], [0]>} : vector<2x8x8xf32>, vector<2x8x8xf32>, vector<2x8x8xf32> -> vector<2x8x8xf32>
    "tpu.trace_stop"() : () -> ()
    %cst_12 = arith.constant dense<0xFF800000> : vector<2x8xf32>
    %17 = vector.multi_reduction <maximumf>, %16, %cst_12 [2] : vector<2x8x8xf32> to vector<2x8xf32>
    %18 = vector.shape_cast %17 : vector<2x8xf32> to vector<2x8x1xf32>
    %19 = vector.broadcast %18 : vector<2x8x1xf32> to vector<2x8x8xf32>
    %20 = arith.subf %16, %19 : vector<2x8x8xf32>
    %21 = math.exp %20 : vector<2x8x8xf32>
    %cst_13 = arith.constant dense<0.000000e+00> : vector<2x8xf32>
    %22 = vector.multi_reduction <add>, %21, %cst_13 [2] : vector<2x8x8xf32> to vector<2x8xf32>
    %23 = vector.shape_cast %22 : vector<2x8xf32> to vector<2x8x1xf32>
    %24 = tpu.reciprocal %23 {approx = true} : vector<2x8x1xf32> -> vector<2x8x1xf32>
    %25 = vector.broadcast %24 : vector<2x8x1xf32> to vector<2x8x8xf32>
    %26 = arith.mulf %21, %25 : vector<2x8x8xf32>
    %c0_14 = arith.constant 0 : index
    %c0_15 = arith.constant 0 : index
    %c0_16 = arith.constant 0 : index
    %c0_17 = arith.constant 0 : index
    %27 = vector.load %arg7[%c0_14, %c0_15, %c0_16, %c0_17] : memref<4x2x8x8xf32, #tpu.memory_space<vmem>>, vector<1x2x8x8xf32>
    %28 = vector.shape_cast %27 : vector<1x2x8x8xf32> to vector<2x8x8xf32>
    %29 = vector.shape_cast %26 : vector<2x8x8xf32> to vector<1x2x8x8xf32>
    tpu.vector_store %arg7[%c0_14, %c0_15, %c0_16, %c0_17], %29 {strides = array<i32>} : memref<4x2x8x8xf32, #tpu.memory_space<vmem>>, vector<1x2x8x8xf32>,
    "tpu.trace_start"() <{level = 10 : i32, message = "bqk,bkd->bqd"}> : () -> ()
    %cst_18 = arith.constant dense<0.000000e+00> : vector<2x8x8xf32>
    %30 = tpu.matmul %26, %15, %cst_18 {dimension_numbers = #tpu.dot_dimension_numbers<[2], [1], [1], [2], [0, 0, 0, 1, 1, 2], [0], [0]>} : vector<2x8x8xf32>, vector<2x8x8xf32>, vector<2x8x8xf32> -> vector<2x8x8xf32>
    "tpu.trace_stop"() : () -> ()
    %31 = vector.extract_strided_slice %11 {offsets = [0, 0, 0], sizes = [2, 8, 32], strides = [1, 1, 1]} : vector<2x32x32xf32> to vector<2x8x32xf32>
    "tpu.trace_start"() <{level = 10 : i32, message = "bqd,bdo->bqo"}> : () -> ()
    %cst_19 = arith.constant dense<0.000000e+00> : vector<2x8x32xf32>
    %32 = tpu.matmul %30, %31, %cst_19 {dimension_numbers = #tpu.dot_dimension_numbers<[2], [1], [1], [2], [0, 0, 0, 1, 1, 2], [0], [0]>} : vector<2x8x8xf32>, vector<2x8x32xf32>, vector<2x8x32xf32> -> vector<2x8x32xf32>
    "tpu.trace_stop"() : () -> ()
    %33 = arith.addf %12, %32 : vector<2x8x32xf32>
    %34 = vector.extract_strided_slice %6 {offsets = [0, 0, 8], sizes = [2, 8, 8], strides = [1, 1, 1]} : vector<2x8x32xf32> to vector<2x8x8xf32>
    %35 = vector.extract_strided_slice %7 {offsets = [0, 0, 8], sizes = [2, 8, 8], strides = [1, 1, 1]} : vector<2x8x32xf32> to vector<2x8x8xf32>
    %36 = vector.extract_strided_slice %8 {offsets = [0, 0, 8], sizes = [2, 8, 8], strides = [1, 1, 1]} : vector<2x8x32xf32> to vector<2x8x8xf32>
    "tpu.trace_start"() <{level = 10 : i32, message = "bqd,bkd->bqk"}> : () -> ()
    %cst_20 = arith.constant dense<0.000000e+00> : vector<2x8x8xf32>
    %37 = tpu.matmul %34, %35, %cst_20 {dimension_numbers = #tpu.dot_dimension_numbers<[2], [2], [1], [1], [0, 0, 0, 1, 1, 1], [0], [0]>} : vector<2x8x8xf32>, vector<2x8x8xf32>, vector<2x8x8xf32> -> vector<2x8x8xf32>
    "tpu.trace_stop"() : () -> ()
    %cst_21 = arith.constant dense<0xFF800000> : vector<2x8xf32>
    %38 = vector.multi_reduction <maximumf>, %37, %cst_21 [2] : vector<2x8x8xf32> to vector<2x8xf32>
    %39 = vector.shape_cast %38 : vector<2x8xf32> to vector<2x8x1xf32>
    %40 = vector.broadcast %39 : vector<2x8x1xf32> to vector<2x8x8xf32>
    %41 = arith.subf %37, %40 : vector<2x8x8xf32>
    %42 = math.exp %41 : vector<2x8x8xf32>
    %cst_22 = arith.constant dense<0.000000e+00> : vector<2x8xf32>
    %43 = vector.multi_reduction <add>, %42, %cst_22 [2] : vector<2x8x8xf32> to vector<2x8xf32>
    %44 = vector.shape_cast %43 : vector<2x8xf32> to vector<2x8x1xf32>
    %45 = tpu.reciprocal %44 {approx = true} : vector<2x8x1xf32> -> vector<2x8x1xf32>
    %46 = vector.broadcast %45 : vector<2x8x1xf32> to vector<2x8x8xf32>
    %47 = arith.mulf %42, %46 : vector<2x8x8xf32>
    %c1 = arith.constant 1 : index
    %c0_23 = arith.constant 0 : index
    %c0_24 = arith.constant 0 : index
    %c0_25 = arith.constant 0 : index
    %48 = vector.load %arg7[%c1, %c0_23, %c0_24, %c0_25] : memref<4x2x8x8xf32, #tpu.memory_space<vmem>>, vector<1x2x8x8xf32>
    %49 = vector.shape_cast %48 : vector<1x2x8x8xf32> to vector<2x8x8xf32>
    %50 = vector.shape_cast %47 : vector<2x8x8xf32> to vector<1x2x8x8xf32>
    tpu.vector_store %arg7[%c1, %c0_23, %c0_24, %c0_25], %50 {strides = array<i32>} : memref<4x2x8x8xf32, #tpu.memory_space<vmem>>, vector<1x2x8x8xf32>,
    "tpu.trace_start"() <{level = 10 : i32, message = "bqk,bkd->bqd"}> : () -> ()
    %cst_26 = arith.constant dense<0.000000e+00> : vector<2x8x8xf32>
    %51 = tpu.matmul %47, %36, %cst_26 {dimension_numbers = #tpu.dot_dimension_numbers<[2], [1], [1], [2], [0, 0, 0, 1, 1, 2], [0], [0]>} : vector<2x8x8xf32>, vector<2x8x8xf32>, vector<2x8x8xf32> -> vector<2x8x8xf32>
    "tpu.trace_stop"() : () -> ()
    %52 = vector.extract_strided_slice %11 {offsets = [0, 8, 0], sizes = [2, 8, 32], strides = [1, 1, 1]} : vector<2x32x32xf32> to vector<2x8x32xf32>
    "tpu.trace_start"() <{level = 10 : i32, message = "bqd,bdo->bqo"}> : () -> ()
    %cst_27 = arith.constant dense<0.000000e+00> : vector<2x8x32xf32>
    %53 = tpu.matmul %51, %52, %cst_27 {dimension_numbers = #tpu.dot_dimension_numbers<[2], [1], [1], [2], [0, 0, 0, 1, 1, 2], [0], [0]>} : vector<2x8x8xf32>, vector<2x8x32xf32>, vector<2x8x32xf32> -> vector<2x8x32xf32>
    "tpu.trace_stop"() : () -> ()
    %54 = arith.addf %33, %53 : vector<2x8x32xf32>
    %55 = vector.extract_strided_slice %6 {offsets = [0, 0, 16], sizes = [2, 8, 8], strides = [1, 1, 1]} : vector<2x8x32xf32> to vector<2x8x8xf32>
    %56 = vector.extract_strided_slice %7 {offsets = [0, 0, 16], sizes = [2, 8, 8], strides = [1, 1, 1]} : vector<2x8x32xf32> to vector<2x8x8xf32>
    %57 = vector.extract_strided_slice %8 {offsets = [0, 0, 16], sizes = [2, 8, 8], strides = [1, 1, 1]} : vector<2x8x32xf32> to vector<2x8x8xf32>
    "tpu.trace_start"() <{level = 10 : i32, message = "bqd,bkd->bqk"}> : () -> ()
    %cst_28 = arith.constant dense<0.000000e+00> : vector<2x8x8xf32>
    %58 = tpu.matmul %55, %56, %cst_28 {dimension_numbers = #tpu.dot_dimension_numbers<[2], [2], [1], [1], [0, 0, 0, 1, 1, 1], [0], [0]>} : vector<2x8x8xf32>, vector<2x8x8xf32>, vector<2x8x8xf32> -> vector<2x8x8xf32>
    "tpu.trace_stop"() : () -> ()
    %cst_29 = arith.constant dense<0xFF800000> : vector<2x8xf32>
    %59 = vector.multi_reduction <maximumf>, %58, %cst_29 [2] : vector<2x8x8xf32> to vector<2x8xf32>
    %60 = vector.shape_cast %59 : vector<2x8xf32> to vector<2x8x1xf32>
    %61 = vector.broadcast %60 : vector<2x8x1xf32> to vector<2x8x8xf32>
    %62 = arith.subf %58, %61 : vector<2x8x8xf32>
    %63 = math.exp %62 : vector<2x8x8xf32>
    %cst_30 = arith.constant dense<0.000000e+00> : vector<2x8xf32>
    %64 = vector.multi_reduction <add>, %63, %cst_30 [2] : vector<2x8x8xf32> to vector<2x8xf32>
    %65 = vector.shape_cast %64 : vector<2x8xf32> to vector<2x8x1xf32>
    %66 = tpu.reciprocal %65 {approx = true} : vector<2x8x1xf32> -> vector<2x8x1xf32>
    %67 = vector.broadcast %66 : vector<2x8x1xf32> to vector<2x8x8xf32>
    %68 = arith.mulf %63, %67 : vector<2x8x8xf32>
    %c2 = arith.constant 2 : index
    %c0_31 = arith.constant 0 : index
    %c0_32 = arith.constant 0 : index
    %c0_33 = arith.constant 0 : index
    %69 = vector.load %arg7[%c2, %c0_31, %c0_32, %c0_33] : memref<4x2x8x8xf32, #tpu.memory_space<vmem>>, vector<1x2x8x8xf32>
    %70 = vector.shape_cast %69 : vector<1x2x8x8xf32> to vector<2x8x8xf32>
    %71 = vector.shape_cast %68 : vector<2x8x8xf32> to vector<1x2x8x8xf32>
    tpu.vector_store %arg7[%c2, %c0_31, %c0_32, %c0_33], %71 {strides = array<i32>} : memref<4x2x8x8xf32, #tpu.memory_space<vmem>>, vector<1x2x8x8xf32>,
    "tpu.trace_start"() <{level = 10 : i32, message = "bqk,bkd->bqd"}> : () -> ()
    %cst_34 = arith.constant dense<0.000000e+00> : vector<2x8x8xf32>
    %72 = tpu.matmul %68, %57, %cst_34 {dimension_numbers = #tpu.dot_dimension_numbers<[2], [1], [1], [2], [0, 0, 0, 1, 1, 2], [0], [0]>} : vector<2x8x8xf32>, vector<2x8x8xf32>, vector<2x8x8xf32> -> vector<2x8x8xf32>
    "tpu.trace_stop"() : () -> ()
    %73 = vector.extract_strided_slice %11 {offsets = [0, 16, 0], sizes = [2, 8, 32], strides = [1, 1, 1]} : vector<2x32x32xf32> to vector<2x8x32xf32>
    "tpu.trace_start"() <{level = 10 : i32, message = "bqd,bdo->bqo"}> : () -> ()
    %cst_35 = arith.constant dense<0.000000e+00> : vector<2x8x32xf32>
    %74 = tpu.matmul %72, %73, %cst_35 {dimension_numbers = #tpu.dot_dimension_numbers<[2], [1], [1], [2], [0, 0, 0, 1, 1, 2], [0], [0]>} : vector<2x8x8xf32>, vector<2x8x32xf32>, vector<2x8x32xf32> -> vector<2x8x32xf32>
    "tpu.trace_stop"() : () -> ()
    %75 = arith.addf %54, %74 : vector<2x8x32xf32>
    %76 = vector.extract_strided_slice %6 {offsets = [0, 0, 24], sizes = [2, 8, 8], strides = [1, 1, 1]} : vector<2x8x32xf32> to vector<2x8x8xf32>
    %77 = vector.extract_strided_slice %7 {offsets = [0, 0, 24], sizes = [2, 8, 8], strides = [1, 1, 1]} : vector<2x8x32xf32> to vector<2x8x8xf32>
    %78 = vector.extract_strided_slice %8 {offsets = [0, 0, 24], sizes = [2, 8, 8], strides = [1, 1, 1]} : vector<2x8x32xf32> to vector<2x8x8xf32>
    "tpu.trace_start"() <{level = 10 : i32, message = "bqd,bkd->bqk"}> : () -> ()
    %cst_36 = arith.constant dense<0.000000e+00> : vector<2x8x8xf32>
    %79 = tpu.matmul %76, %77, %cst_36 {dimension_numbers = #tpu.dot_dimension_numbers<[2], [2], [1], [1], [0, 0, 0, 1, 1, 1], [0], [0]>} : vector<2x8x8xf32>, vector<2x8x8xf32>, vector<2x8x8xf32> -> vector<2x8x8xf32>
    "tpu.trace_stop"() : () -> ()
    %cst_37 = arith.constant dense<0xFF800000> : vector<2x8xf32>
    %80 = vector.multi_reduction <maximumf>, %79, %cst_37 [2] : vector<2x8x8xf32> to vector<2x8xf32>
    %81 = vector.shape_cast %80 : vector<2x8xf32> to vector<2x8x1xf32>
    %82 = vector.broadcast %81 : vector<2x8x1xf32> to vector<2x8x8xf32>
    %83 = arith.subf %79, %82 : vector<2x8x8xf32>
    %84 = math.exp %83 : vector<2x8x8xf32>
    %cst_38 = arith.constant dense<0.000000e+00> : vector<2x8xf32>
    %85 = vector.multi_reduction <add>, %84, %cst_38 [2] : vector<2x8x8xf32> to vector<2x8xf32>
    %86 = vector.shape_cast %85 : vector<2x8xf32> to vector<2x8x1xf32>
    %87 = tpu.reciprocal %86 {approx = true} : vector<2x8x1xf32> -> vector<2x8x1xf32>
    %88 = vector.broadcast %87 : vector<2x8x1xf32> to vector<2x8x8xf32>
    %89 = arith.mulf %84, %88 : vector<2x8x8xf32>
    %c3 = arith.constant 3 : index
    %c0_39 = arith.constant 0 : index
    %c0_40 = arith.constant 0 : index
    %c0_41 = arith.constant 0 : index
    %90 = vector.load %arg7[%c3, %c0_39, %c0_40, %c0_41] : memref<4x2x8x8xf32, #tpu.memory_space<vmem>>, vector<1x2x8x8xf32>
    %91 = vector.shape_cast %90 : vector<1x2x8x8xf32> to vector<2x8x8xf32>
    %92 = vector.shape_cast %89 : vector<2x8x8xf32> to vector<1x2x8x8xf32>
    tpu.vector_store %arg7[%c3, %c0_39, %c0_40, %c0_41], %92 {strides = array<i32>} : memref<4x2x8x8xf32, #tpu.memory_space<vmem>>, vector<1x2x8x8xf32>,
    "tpu.trace_start"() <{level = 10 : i32, message = "bqk,bkd->bqd"}> : () -> ()
    %cst_42 = arith.constant dense<0.000000e+00> : vector<2x8x8xf32>
    %93 = tpu.matmul %89, %78, %cst_42 {dimension_numbers = #tpu.dot_dimension_numbers<[2], [1], [1], [2], [0, 0, 0, 1, 1, 2], [0], [0]>} : vector<2x8x8xf32>, vector<2x8x8xf32>, vector<2x8x8xf32> -> vector<2x8x8xf32>
    "tpu.trace_stop"() : () -> ()
    %94 = vector.extract_strided_slice %11 {offsets = [0, 24, 0], sizes = [2, 8, 32], strides = [1, 1, 1]} : vector<2x32x32xf32> to vector<2x8x32xf32>
    "tpu.trace_start"() <{level = 10 : i32, message = "bqd,bdo->bqo"}> : () -> ()
    %cst_43 = arith.constant dense<0.000000e+00> : vector<2x8x32xf32>
    %95 = tpu.matmul %93, %94, %cst_43 {dimension_numbers = #tpu.dot_dimension_numbers<[2], [1], [1], [2], [0, 0, 0, 1, 1, 2], [0], [0]>} : vector<2x8x8xf32>, vector<2x8x32xf32>, vector<2x8x32xf32> -> vector<2x8x32xf32>
    "tpu.trace_stop"() : () -> ()
    %96 = arith.addf %75, %95 : vector<2x8x32xf32>
    %c0_44 = arith.constant 0 : index
    %c0_45 = arith.constant 0 : index
    %97 = vector.load %arg5[%c0_44, %c0_45] : memref<1x32xf32, #tpu.memory_space<vmem>>, vector<1x32xf32>
    %98 = vector.shape_cast %97 : vector<1x32xf32> to vector<1x1x32xf32>
    %99 = vector.broadcast %98 : vector<1x1x32xf32> to vector<2x8x32xf32>
    %100 = arith.addf %96, %99 : vector<2x8x32xf32>
    %c0_46 = arith.constant 0 : index
    %c0_47 = arith.constant 0 : index
    %c0_48 = arith.constant 0 : index
    %101 = vector.load %arg6[%c0_46, %c0_47, %c0_48] : memref<2x8x32xf32, #tpu.memory_space<vmem>>, vector<2x8x32xf32>
    tpu.vector_store %arg6[%c0_46, %c0_47, %c0_48], %100 {strides = array<i32>} : memref<2x8x32xf32, #tpu.memory_space<vmem>>, vector<2x8x32xf32>,
    return
  }
  func.func @transform_0(%arg0: i32) -> (i32, i32, i32) {
    %c0_i32 = arith.constant 0 : i32
    %c0_i32_0 = arith.constant 0 : i32
    %c0_i32_1 = arith.constant 0 : i32
    %c0_i32_2 = arith.constant 0 : i32
    return %c0_i32, %c0_i32_0, %c0_i32_1 : i32, i32, i32
  }
  func.func @transform_1(%arg0: i32) -> (i32, i32, i32) {
    %c0_i32 = arith.constant 0 : i32
    %c0_i32_0 = arith.constant 0 : i32
    %c0_i32_1 = arith.constant 0 : i32
    %c0_i32_2 = arith.constant 0 : i32
    return %c0_i32, %c0_i32_0, %c0_i32_1 : i32, i32, i32
  }
  func.func @transform_2(%arg0: i32) -> (i32, i32, i32) {
    %c0_i32 = arith.constant 0 : i32
    %c0_i32_0 = arith.constant 0 : i32
    %c0_i32_1 = arith.constant 0 : i32
    %c0_i32_2 = arith.constant 0 : i32
    return %c0_i32, %c0_i32_0, %c0_i32_1 : i32, i32, i32
  }
  func.func @transform_3(%arg0: i32) -> (i32, i32) {
    %c0_i32 = arith.constant 0 : i32
    %c0_i32_0 = arith.constant 0 : i32
    %c0_i32_1 = arith.constant 0 : i32
    return %c0_i32, %c0_i32_0 : i32, i32
  }
  func.func @transform_4(%arg0: i32) -> (i32, i32) {
    %c0_i32 = arith.constant 0 : i32
    %c0_i32_0 = arith.constant 0 : i32
    %c0_i32_1 = arith.constant 0 : i32
    return %c0_i32, %c0_i32_0 : i32, i32
  }
  func.func @transform_5(%arg0: i32) -> (i32, i32, i32) {
    %c0_i32 = arith.constant 0 : i32
    %c0_i32_0 = arith.constant 0 : i32
    %c0_i32_1 = arith.constant 0 : i32
    %c0_i32_2 = arith.constant 0 : i32
    return %c0_i32, %c0_i32_0, %c0_i32_1 : i32, i32, i32
  }
  func.func @transform_6(%arg0: i32) -> (i32, i32, i32, i32) {
    %c0_i32 = arith.constant 0 : i32
    %c0_i32_0 = arith.constant 0 : i32
    %c0_i32_1 = arith.constant 0 : i32
    %c0_i32_2 = arith.constant 0 : i32
    %c0_i32_3 = arith.constant 0 : i32
    return %c0_i32, %c0_i32_0, %c0_i32_1, %c0_i32_2 : i32, i32, i32, i32
  }
}

</mosaic_0001>

<llo_original>
// kernel: tpu_custom_call.1
$region0: #{tpu_custom_call.1}
  #allocation0 [shape = 'u32[]', space=smem, size = 0x4, offset = 0x4, fixed_abs, tag = 'smem constant byte address 0x4 - core index']
  #allocation1 [shape = 'u32[144,128]{1,0:T(1,128)}', space=vmem, size = 0x12000, scoped, tag = 'internal scratch']
  %s0 = inlined_call_operand.hbm [shape: f32[6,8,32], index: 0, kind: input, shape index: {}]
  %s1 = inlined_call_operand.hbm [shape: f32[6,32,32], index: 1, kind: input, shape index: {}]
  %s2 = inlined_call_operand.hbm [shape: f32[6,1,32], index: 2, kind: input, shape index: {}]
  %s3 = inlined_call_operand.hbm [shape: f32[32,32], index: 3, kind: input, shape index: {}]
  %s4 = inlined_call_operand.vmem [shape: f32[1,32], index: 4, kind: input, shape index: {}]
  %s5 = inlined_call_operand.hbm [shape: f32[2,8,32], index: 5, kind: output, shape index: {0}]
  %s6 = inlined_call_operand.hbm [shape: f32[4,2,8,8], index: 6, kind: output, shape index: {1}]
  %7 = xla_tuple %s5, %s6
  %s8 = sld [smem:[#allocation0]]
  $region54: #{tpu_custom_call.1} parent=0
    _
  %s10 = ssub.s32 1, %s8
  %s11 = scalar_select 0, %s10, %s8
  $region1: #{tpu_custom_call.1} parent=0
    #allocation2 [shape = 'u8[24576]{0}', space=vmem, size = 0x6000, scoped, tag = 'input window, operand 0, single buffered']
    #allocation3 [shape = 's32[1]{0}', space=sflag, size = 0x4, scoped, tag = 'scoped memory for tpu_custom_call.1']
    #allocation4 [shape = 's32[1]{0}', space=sflag, size = 0x4, scoped, tag = 'scoped memory for tpu_custom_call.1']
    #allocation5 [shape = 'u8[98304]{0}', space=vmem, size = 0x18000, scoped, tag = 'input window, operand 1, single buffered']
    #allocation6 [shape = 's32[1]{0}', space=sflag, size = 0x4, scoped, tag = 'scoped memory for tpu_custom_call.1']
    #allocation7 [shape = 'u8[3072]{0}', space=vmem, size = 0xc00, scoped, tag = 'input window, operand 2, single buffered']
    #allocation8 [shape = 'u8[16384]{0}', space=vmem, size = 0x4000, scoped, tag = 'input window, operand 3, single buffered']
    #allocation9 [shape = 's32[1]{0}', space=sflag, size = 0x4, scoped, tag = 'scoped memory for tpu_custom_call.1']
    #allocation10 [shape = 'u8[8192]{0}', space=vmem, size = 0x2000, scoped, tag = 'output window, operand 0, single buffered']
    #allocation11 [shape = 'u8[32768]{0}', space=vmem, size = 0x8000, scoped, tag = 'output window, operand 1, single buffered']
    #allocation12 [shape = 's32[1]{0}', space=sflag, size = 0x4, scoped, tag = 'scoped memory for tpu_custom_call.1']
    %12 = vsyncpa [#allocation3], 0
    %13 = vsyncpa [#allocation6], 0
    %14 = vsyncpa [#allocation9], 0
    %15 = vsyncpa [#allocation4], 0
    %16 = vsyncpa [#allocation12], 0
    // Predicated region
    $region2: #{tpu_custom_call.1} parent=1 // pred_check
      _
    $region3: #{tpu_custom_call.1} parent=1 // pred_check_branch
      %18 = sbr.rel (0) target = $region5
    $region4: #{tpu_custom_call.1} parent=1 // pred_region
      %s20 = ssub.s32 768, 768
      %21 = vsyncadd [#allocation3], %s20
      %s22 = sshll.u32 [#allocation2], 4
      %s23 = int_to_ptr.vmem [resolvable:$true] %s22
      %28 = dma.hbm_to_vmem [thread:$0]  %s0, 768, %s23, [#allocation3], 128, 128, 8
    $region5: #{tpu_custom_call.1} parent=1 // pred_fallthru
      _
    // Predicated region
    $region6: #{tpu_custom_call.1} parent=1 // pred_check
      _
    $region7: #{tpu_custom_call.1} parent=1 // pred_check_branch
      %30 = sbr.rel (0) target = $region9
    $region8: #{tpu_custom_call.1} parent=1 // pred_region
      %s32 = ssub.s32 3072, 3072
      %33 = vsyncadd [#allocation6], %s32
      %s34 = sshll.u32 [#allocation5], 4
      %s35 = int_to_ptr.vmem [resolvable:$true] %s34
      %40 = dma.hbm_to_vmem [thread:$0]  %s1, 3072, %s35, [#allocation6], 128, 128, 8
    $region9: #{tpu_custom_call.1} parent=1 // pred_fallthru
      _
    // Predicated region
    $region10: #{tpu_custom_call.1} parent=1 // pred_check
      _
    $region11: #{tpu_custom_call.1} parent=1 // pred_check_branch
      %42 = sbr.rel (0) target = $region13
    $region12: #{tpu_custom_call.1} parent=1 // pred_region
      %s44 = ssub.s32 96, 96
      %45 = vsyncadd [#allocation6], %s44
      %s46 = sshll.u32 [#allocation7], 4
      %s47 = int_to_ptr.vmem [resolvable:$true] %s46
      %52 = dma.hbm_to_vmem [thread:$0]  %s2, 96, %s47, [#allocation6], 16, 16, 1
    $region13: #{tpu_custom_call.1} parent=1 // pred_fallthru
      _
    // Predicated region
    $region14: #{tpu_custom_call.1} parent=1 // pred_check
      _
    $region15: #{tpu_custom_call.1} parent=1 // pred_check_branch
      %54 = sbr.rel (0) target = $region17
    $region16: #{tpu_custom_call.1} parent=1 // pred_region
      %s56 = ssub.s32 512, 512
      %57 = vsyncadd [#allocation9], %s56
      %s58 = sshll.u32 [#allocation8], 4
      %s59 = int_to_ptr.vmem [resolvable:$true] %s58
      %64 = dma.hbm_to_vmem [thread:$0]  %s3, 512, %s59, [#allocation9], 128, 128, 8
    $region17: #{tpu_custom_call.1} parent=1 // pred_fallthru
      _
    // Predicated region
    $region18: #{tpu_custom_call.1} parent=1 // pred_check
      _
    $region19: #{tpu_custom_call.1} parent=1 // pred_check_branch
      %66 = sbr.rel (0) target = $region21
    $region20: #{tpu_custom_call.1} parent=1 // pred_region
      _
    $region21: #{tpu_custom_call.1} parent=1 // pred_fallthru
      _
    // Predicated region
    $region22: #{tpu_custom_call.1} parent=1 // pred_check
      _
    $region23: #{tpu_custom_call.1} parent=1 // pred_check_branch
      %68 = sbr.rel (0) target = $region25
    $region24: #{tpu_custom_call.1} parent=1 // pred_region
      %69 = dma.done [#allocation3], 768
    $region25: #{tpu_custom_call.1} parent=1 // pred_fallthru
      _
    // Predicated region
    $region26: #{tpu_custom_call.1} parent=1 // pred_check
      _
    $region27: #{tpu_custom_call.1} parent=1 // pred_check_branch
      %71 = sbr.rel (0) target = $region29
    $region28: #{tpu_custom_call.1} parent=1 // pred_region
      %72 = dma.done [#allocation6], 3072
    $region29: #{tpu_custom_call.1} parent=1 // pred_fallthru
      _
    // Predicated region
    $region30: #{tpu_custom_call.1} parent=1 // pred_check
      _
    $region31: #{tpu_custom_call.1} parent=1 // pred_check_branch
      %74 = sbr.rel (0) target = $region33
    $region32: #{tpu_custom_call.1} parent=1 // pred_region
      %75 = dma.done [#allocation6], 96
    $region33: #{tpu_custom_call.1} parent=1 // pred_fallthru
      _
    // Predicated region
    $region34: #{tpu_custom_call.1} parent=1 // pred_check
      _
    $region35: #{tpu_custom_call.1} parent=1 // pred_check_branch
      %77 = sbr.rel (0) target = $region37
    $region36: #{tpu_custom_call.1} parent=1 // pred_region
      %78 = dma.done [#allocation9], 512
    $region37: #{tpu_custom_call.1} parent=1 // pred_fallthru
      _
    %v79 = vld [vmem:[#allocation2] sm:$0xff]
    %v80 = vld [vmem:[#allocation2 + $0x8] sm:$0xff]
    %v81 = vld [vmem:[#allocation2 + $0x10] sm:$0xff]
    %v82 = vld [vmem:[#allocation2 + $0x18] sm:$0xff]
    %v83 = vld [vmem:[#allocation2 + $0x20] sm:$0xff]
    %v84 = vld [vmem:[#allocation2 + $0x28] sm:$0xff]
    %v85 = vld [vmem:[#allocation5] sm:$0xff]
    %v86 = vld [vmem:[#allocation5 + $0x8] sm:$0xff]
    %v87 = vld [vmem:[#allocation5 + $0x10] sm:$0xff]
    %v88 = vld [vmem:[#allocation5 + $0x18] sm:$0xff]
    %v89 = vld [vmem:[#allocation5 + $0x20] sm:$0xff]
    %v90 = vld [vmem:[#allocation5 + $0x28] sm:$0xff]
    %v91 = vld [vmem:[#allocation5 + $0x30] sm:$0xff]
    %v92 = vld [vmem:[#allocation5 + $0x38] sm:$0xff]
    %v93 = vld [vmem:[#allocation5 + $0x40] sm:$0xff]
    %v94 = vld [vmem:[#allocation5 + $0x48] sm:$0xff]
    %v95 = vld [vmem:[#allocation5 + $0x50] sm:$0xff]
    %v96 = vld [vmem:[#allocation5 + $0x58] sm:$0xff]
    %v97 = vld [vmem:[#allocation5 + $0x60] sm:$0xff]
    %v98 = vld [vmem:[#allocation5 + $0x68] sm:$0xff]
    %v99 = vld [vmem:[#allocation5 + $0x70] sm:$0xff]
    %v100 = vld [vmem:[#allocation5 + $0x78] sm:$0xff]
    %v101 = vld [vmem:[#allocation5 + $0x80] sm:$0xff]
    %v102 = vld [vmem:[#allocation5 + $0x88] sm:$0xff]
    %v103 = vld [vmem:[#allocation5 + $0x90] sm:$0xff]
    %v104 = vld [vmem:[#allocation5 + $0x98] sm:$0xff]
    %v105 = vld [vmem:[#allocation5 + $0xa0] sm:$0xff]
    %v106 = vld [vmem:[#allocation5 + $0xa8] sm:$0xff]
    %v107 = vld [vmem:[#allocation5 + $0xb0] sm:$0xff]
    %v108 = vld [vmem:[#allocation5 + $0xb8] sm:$0xff]
    %v109 = vld [vmem:[#allocation7] sm:$0x1]
    %v110 = vld [vmem:[#allocation7 + $0x1] sm:$0x1]
    %v111 = vld [vmem:[#allocation7 + $0x2] sm:$0x1]
    %v112 = vld [vmem:[#allocation7 + $0x3] sm:$0x1]
    %v113 = vld [vmem:[#allocation7 + $0x4] sm:$0x1]
    %v114 = vld [vmem:[#allocation7 + $0x5] sm:$0x1]
    %v121 = vlaneseq
    %v122 = vshrl.u32 %v121, 7
    %v123 = vsub.s32 0, %v122
    %v124 = vrot.slane %v109, %v123
    %v125 = vlaneseq
    %v126 = vshrl.u32 %v125, 7
    %v127 = vsub.s32 0, %v126
    %v128 = vrot.slane %v110, %v127
    %v129 = vlaneseq
    %v130 = vshrl.u32 %v129, 7
    %v131 = vsub.s32 0, %v130
    %v132 = vrot.slane %v111, %v131
    %v133 = vlaneseq
    %v134 = vshrl.u32 %v133, 7
    %v135 = vsub.s32 0, %v134
    %v136 = vrot.slane %v112, %v135
    %v137 = vlaneseq
    %v138 = vshrl.u32 %v137, 7
    %v139 = vsub.s32 0, %v138
    %v140 = vrot.slane %v113, %v139
    %v141 = vlaneseq
    %v142 = vshrl.u32 %v141, 7
    %v143 = vsub.s32 0, %v142
    %v144 = vrot.slane %v114, %v143
    %vm151 = vcmask 261120
    %v153 = vsel %vm151, %v79, 0
    %155 = vmatprep.subr.mxu0 0.0
    %156 = vmatpush1.msra.mxu0 0.0
    %157 = vmatprep.subr.mxu0 0.0
    %158 = vmatpush1.msra.mxu0 0.0
    %159 = vmatprep.subr.mxu0 0.0
    %160 = vmatpush1.msra.mxu0 0.0
    %161 = vmatprep.subr.mxu0 0.0
    %162 = vmatpush1.msra.mxu0 0.0
    %163 = vmatprep.subr.mxu0 0.0
    %164 = vmatpush1.msra.mxu0 0.0
    %165 = vmatprep.subr.mxu0 0.0
    %166 = vmatpush1.msra.mxu0 0.0
    %167 = vmatprep.subr.mxu0 0.0
    %168 = vmatpush1.msra.mxu0 0.0
    %169 = vmatprep.subr.mxu0 0.0
    %170 = vmatpush1.msra.mxu0 0.0
    %171 = vmatprep.subr.mxu0 0.0
    %172 = vmatpush1.msra.mxu0 0.0
    %173 = vmatprep.subr.mxu0 0.0
    %174 = vmatpush1.msra.mxu0 0.0
    %175 = vmatprep.subr.mxu0 0.0
    %176 = vmatpush1.msra.mxu0 0.0
    %177 = vmatprep.subr.mxu0 0.0
    %178 = vmatpush1.msra.mxu0 0.0
    %179 = vmatprep.subr.mxu0 0.0
    %180 = vmatpush1.msra.mxu0 %v88
    %181 = vmatprep.subr.mxu0 0.0
    %182 = vmatpush1.msra.mxu0 %v87
    %183 = vmatprep.subr.mxu0 0.0
    %184 = vmatpush1.msra.mxu0 %v86
    %185 = vmatprep.subr.mxu0 0.0
    %186 = vmatpush1.msra.mxu0 %v85
    %187 = vmatprep.subr.mxu0 0.0
    %188 = vmatpush2.msra.mxu0 0.0
    %189 = vmatprep.subr.mxu0 0.0
    %190 = vmatpush2.msra.mxu0 0.0
    %191 = vmatprep.subr.mxu0 0.0
    %192 = vmatpush2.msra.mxu0 0.0
    %193 = vmatprep.subr.mxu0 0.0
    %194 = vmatpush2.msra.mxu0 0.0
    %195 = vmatprep.subr.mxu0 0.0
    %196 = vmatpush2.msra.mxu0 0.0
    %197 = vmatprep.subr.mxu0 0.0
    %198 = vmatpush2.msra.mxu0 0.0
    %199 = vmatprep.subr.mxu0 0.0
    %200 = vmatpush2.msra.mxu0 0.0
    %201 = vmatprep.subr.mxu0 0.0
    %202 = vmatpush2.msra.mxu0 0.0
    %203 = vmatprep.subr.mxu0 0.0
    %204 = vmatpush2.msra.mxu0 0.0
    %205 = vmatprep.subr.mxu0 0.0
    %206 = vmatpush2.msra.mxu0 0.0
    %207 = vmatprep.subr.mxu0 0.0
    %208 = vmatpush2.msra.mxu0 0.0
    %209 = vmatprep.subr.mxu0 0.0
    %210 = vmatpush2.msra.mxu0 0.0
    %211 = vmatprep.subr.mxu0 0.0
    %212 = vmatpush2.msra.mxu0 0.0
    %213 = vmatprep.subr.mxu0 0.0
    %214 = vmatpush2.msra.mxu0 0.0
    %215 = vmatprep.subr.mxu0 0.0
    %216 = vmatpush2.msra.mxu0 0.0
    %217 = vmatprep.subr.mxu0 0.0
    %218 = vmatpush2.msra.mxu0 0.0
    %219 = vmatprep.mubr.f32.mxu0 0.0
    %220 = vmatmul.mubr.f32.gmra.mxu0 %v153
    %v221 = vpop.f32.mrf.mxu0
    %v222 = vadd.f32 %v124, %v221
    %v223 = vpop.f32.mrf.mxu0
    %224 = vdwg.mxu0
    %v226 = vsel %vm151, %v80, 0
    %228 = vmatprep.subr.mxu0 0.0
    %229 = vmatpush1.msra.mxu0 0.0
    %230 = vmatprep.subr.mxu0 0.0
    %231 = vmatpush1.msra.mxu0 0.0
    %232 = vmatprep.subr.mxu0 0.0
    %233 = vmatpush1.msra.mxu0 0.0
    %234 = vmatprep.subr.mxu0 0.0
    %235 = vmatpush1.msra.mxu0 0.0
    %236 = vmatprep.subr.mxu0 0.0
    %237 = vmatpush1.msra.mxu0 0.0
    %238 = vmatprep.subr.mxu0 0.0
    %239 = vmatpush1.msra.mxu0 0.0
    %240 = vmatprep.subr.mxu0 0.0
    %241 = vmatpush1.msra.mxu0 0.0
    %242 = vmatprep.subr.mxu0 0.0
    %243 = vmatpush1.msra.mxu0 0.0
    %244 = vmatprep.subr.mxu0 0.0
    %245 = vmatpush1.msra.mxu0 0.0
    %246 = vmatprep.subr.mxu0 0.0
    %247 = vmatpush1.msra.mxu0 0.0
    %248 = vmatprep.subr.mxu0 0.0
    %249 = vmatpush1.msra.mxu0 0.0
    %250 = vmatprep.subr.mxu0 0.0
    %251 = vmatpush1.msra.mxu0 0.0
    %252 = vmatprep.subr.mxu0 0.0
    %253 = vmatpush1.msra.mxu0 %v92
    %254 = vmatprep.subr.mxu0 0.0
    %255 = vmatpush1.msra.mxu0 %v91
    %256 = vmatprep.subr.mxu0 0.0
    %257 = vmatpush1.msra.mxu0 %v90
    %258 = vmatprep.subr.mxu0 0.0
    %259 = vmatpush1.msra.mxu0 %v89
    %260 = vmatprep.subr.mxu0 0.0
    %261 = vmatpush2.msra.mxu0 0.0
    %262 = vmatprep.subr.mxu0 0.0
    %263 = vmatpush2.msra.mxu0 0.0
    %264 = vmatprep.subr.mxu0 0.0
    %265 = vmatpush2.msra.mxu0 0.0
    %266 = vmatprep.subr.mxu0 0.0
    %267 = vmatpush2.msra.mxu0 0.0
    %268 = vmatprep.subr.mxu0 0.0
    %269 = vmatpush2.msra.mxu0 0.0
    %270 = vmatprep.subr.mxu0 0.0
    %271 = vmatpush2.msra.mxu0 0.0
    %272 = vmatprep.subr.mxu0 0.0
    %273 = vmatpush2.msra.mxu0 0.0
    %274 = vmatprep.subr.mxu0 0.0
    %275 = vmatpush2.msra.mxu0 0.0
    %276 = vmatprep.subr.mxu0 0.0
    %277 = vmatpush2.msra.mxu0 0.0
    %278 = vmatprep.subr.mxu0 0.0
    %279 = vmatpush2.msra.mxu0 0.0
    %280 = vmatprep.subr.mxu0 0.0
    %281 = vmatpush2.msra.mxu0 0.0
    %282 = vmatprep.subr.mxu0 0.0
    %283 = vmatpush2.msra.mxu0 0.0
    %284 = vmatprep.subr.mxu0 0.0
    %285 = vmatpush2.msra.mxu0 0.0
    %286 = vmatprep.subr.mxu0 0.0
    %287 = vmatpush2.msra.mxu0 0.0
    %288 = vmatprep.subr.mxu0 0.0
    %289 = vmatpush2.msra.mxu0 0.0
    %290 = vmatprep.subr.mxu0 0.0
    %291 = vmatpush2.msra.mxu0 0.0
    %292 = vmatprep.mubr.f32.mxu0 0.0
    %293 = vmatmul.mubr.f32.gmra.mxu0 %v226
    %v294 = vpop.f32.mrf.mxu0
    %v295 = vadd.f32 %v128, %v294
    %v296 = vpop.f32.mrf.mxu0
    %297 = vdwg.mxu0
    %v299 = vsel %vm151, %v81, 0
    %301 = vmatprep.subr.mxu0 0.0
    %302 = vmatpush1.msra.mxu0 0.0
    %303 = vmatprep.subr.mxu0 0.0
    %304 = vmatpush1.msra.mxu0 0.0
    %305 = vmatprep.subr.mxu0 0.0
    %306 = vmatpush1.msra.mxu0 0.0
    %307 = vmatprep.subr.mxu0 0.0
    %308 = vmatpush1.msra.mxu0 0.0
    %309 = vmatprep.subr.mxu0 0.0
    %310 = vmatpush1.msra.mxu0 0.0
    %311 = vmatprep.subr.mxu0 0.0
    %312 = vmatpush1.msra.mxu0 0.0
    %313 = vmatprep.subr.mxu0 0.0
    %314 = vmatpush1.msra.mxu0 0.0
    %315 = vmatprep.subr.mxu0 0.0
    %316 = vmatpush1.msra.mxu0 0.0
    %317 = vmatprep.subr.mxu0 0.0
    %318 = vmatpush1.msra.mxu0 0.0
    %319 = vmatprep.subr.mxu0 0.0
    %320 = vmatpush1.msra.mxu0 0.0
    %321 = vmatprep.subr.mxu0 0.0
    %322 = vmatpush1.msra.mxu0 0.0
    %323 = vmatprep.subr.mxu0 0.0
    %324 = vmatpush1.msra.mxu0 0.0
    %325 = vmatprep.subr.mxu0 0.0
    %326 = vmatpush1.msra.mxu0 %v96
    %327 = vmatprep.subr.mxu0 0.0
    %328 = vmatpush1.msra.mxu0 %v95
    %329 = vmatprep.subr.mxu0 0.0
    %330 = vmatpush1.msra.mxu0 %v94
    %331 = vmatprep.subr.mxu0 0.0
    %332 = vmatpush1.msra.mxu0 %v93
    %333 = vmatprep.subr.mxu0 0.0
    %334 = vmatpush2.msra.mxu0 0.0
    %335 = vmatprep.subr.mxu0 0.0
    %336 = vmatpush2.msra.mxu0 0.0
    %337 = vmatprep.subr.mxu0 0.0
    %338 = vmatpush2.msra.mxu0 0.0
    %339 = vmatprep.subr.mxu0 0.0
    %340 = vmatpush2.msra.mxu0 0.0
    %341 = vmatprep.subr.mxu0 0.0
    %342 = vmatpush2.msra.mxu0 0.0
    %343 = vmatprep.subr.mxu0 0.0
    %344 = vmatpush2.msra.mxu0 0.0
    %345 = vmatprep.subr.mxu0 0.0
    %346 = vmatpush2.msra.mxu0 0.0
    %347 = vmatprep.subr.mxu0 0.0
    %348 = vmatpush2.msra.mxu0 0.0
    %349 = vmatprep.subr.mxu0 0.0
    %350 = vmatpush2.msra.mxu0 0.0
    %351 = vmatprep.subr.mxu0 0.0
    %352 = vmatpush2.msra.mxu0 0.0
    %353 = vmatprep.subr.mxu0 0.0
    %354 = vmatpush2.msra.mxu0 0.0
    %355 = vmatprep.subr.mxu0 0.0
    %356 = vmatpush2.msra.mxu0 0.0
    %357 = vmatprep.subr.mxu0 0.0
    %358 = vmatpush2.msra.mxu0 0.0
    %359 = vmatprep.subr.mxu0 0.0
    %360 = vmatpush2.msra.mxu0 0.0
    %361 = vmatprep.subr.mxu0 0.0
    %362 = vmatpush2.msra.mxu0 0.0
    %363 = vmatprep.subr.mxu0 0.0
    %364 = vmatpush2.msra.mxu0 0.0
    %365 = vmatprep.mubr.f32.mxu0 0.0
    %366 = vmatmul.mubr.f32.gmra.mxu0 %v299
    %v367 = vpop.f32.mrf.mxu0
    %v368 = vadd.f32 %v132, %v367
    %v369 = vpop.f32.mrf.mxu0
    %370 = vdwg.mxu0
    %v372 = vsel %vm151, %v82, 0
    %374 = vmatprep.subr.mxu0 0.0
    %375 = vmatpush1.msra.mxu0 0.0
    %376 = vmatprep.subr.mxu0 0.0
    %377 = vmatpush1.msra.mxu0 0.0
    %378 = vmatprep.subr.mxu0 0.0
    %379 = vmatpush1.msra.mxu0 0.0
    %380 = vmatprep.subr.mxu0 0.0
    %381 = vmatpush1.msra.mxu0 0.0
    %382 = vmatprep.subr.mxu0 0.0
    %383 = vmatpush1.msra.mxu0 0.0
    %384 = vmatprep.subr.mxu0 0.0
    %385 = vmatpush1.msra.mxu0 0.0
    %386 = vmatprep.subr.mxu0 0.0
    %387 = vmatpush1.msra.mxu0 0.0
    %388 = vmatprep.subr.mxu0 0.0
    %389 = vmatpush1.msra.mxu0 0.0
    %390 = vmatprep.subr.mxu0 0.0
    %391 = vmatpush1.msra.mxu0 0.0
    %392 = vmatprep.subr.mxu0 0.0
    %393 = vmatpush1.msra.mxu0 0.0
    %394 = vmatprep.subr.mxu0 0.0
    %395 = vmatpush1.msra.mxu0 0.0
    %396 = vmatprep.subr.mxu0 0.0
    %397 = vmatpush1.msra.mxu0 0.0
    %398 = vmatprep.subr.mxu0 0.0
    %399 = vmatpush1.msra.mxu0 %v100
    %400 = vmatprep.subr.mxu0 0.0
    %401 = vmatpush1.msra.mxu0 %v99
    %402 = vmatprep.subr.mxu0 0.0
    %403 = vmatpush1.msra.mxu0 %v98
    %404 = vmatprep.subr.mxu0 0.0
    %405 = vmatpush1.msra.mxu0 %v97
    %406 = vmatprep.subr.mxu0 0.0
    %407 = vmatpush2.msra.mxu0 0.0
    %408 = vmatprep.subr.mxu0 0.0
    %409 = vmatpush2.msra.mxu0 0.0
    %410 = vmatprep.subr.mxu0 0.0
    %411 = vmatpush2.msra.mxu0 0.0
    %412 = vmatprep.subr.mxu0 0.0
    %413 = vmatpush2.msra.mxu0 0.0
    %414 = vmatprep.subr.mxu0 0.0
    %415 = vmatpush2.msra.mxu0 0.0
    %416 = vmatprep.subr.mxu0 0.0
    %417 = vmatpush2.msra.mxu0 0.0
    %418 = vmatprep.subr.mxu0 0.0
    %419 = vmatpush2.msra.mxu0 0.0
    %420 = vmatprep.subr.mxu0 0.0
    %421 = vmatpush2.msra.mxu0 0.0
    %422 = vmatprep.subr.mxu0 0.0
    %423 = vmatpush2.msra.mxu0 0.0
    %424 = vmatprep.subr.mxu0 0.0
    %425 = vmatpush2.msra.mxu0 0.0
    %426 = vmatprep.subr.mxu0 0.0
    %427 = vmatpush2.msra.mxu0 0.0
    %428 = vmatprep.subr.mxu0 0.0
    %429 = vmatpush2.msra.mxu0 0.0
    %430 = vmatprep.subr.mxu0 0.0
    %431 = vmatpush2.msra.mxu0 0.0
    %432 = vmatprep.subr.mxu0 0.0
    %433 = vmatpush2.msra.mxu0 0.0
    %434 = vmatprep.subr.mxu0 0.0
    %435 = vmatpush2.msra.mxu0 0.0
    %436 = vmatprep.subr.mxu0 0.0
    %437 = vmatpush2.msra.mxu0 0.0
    %438 = vmatprep.mubr.f32.mxu0 0.0
    %439 = vmatmul.mubr.f32.gmra.mxu0 %v372
    %v440 = vpop.f32.mrf.mxu0
    %v441 = vadd.f32 %v136, %v440
    %v442 = vpop.f32.mrf.mxu0
    %443 = vdwg.mxu0
    %v445 = vsel %vm151, %v83, 0
    %447 = vmatprep.subr.mxu0 0.0
    %448 = vmatpush1.msra.mxu0 0.0
    %449 = vmatprep.subr.mxu0 0.0
    %450 = vmatpush1.msra.mxu0 0.0
    %451 = vmatprep.subr.mxu0 0.0
    %452 = vmatpush1.msra.mxu0 0.0
    %453 = vmatprep.subr.mxu0 0.0
    %454 = vmatpush1.msra.mxu0 0.0
    %455 = vmatprep.subr.mxu0 0.0
    %456 = vmatpush1.msra.mxu0 0.0
    %457 = vmatprep.subr.mxu0 0.0
    %458 = vmatpush1.msra.mxu0 0.0
    %459 = vmatprep.subr.mxu0 0.0
    %460 = vmatpush1.msra.mxu0 0.0
    %461 = vmatprep.subr.mxu0 0.0
    %462 = vmatpush1.msra.mxu0 0.0
    %463 = vmatprep.subr.mxu0 0.0
    %464 = vmatpush1.msra.mxu0 0.0
    %465 = vmatprep.subr.mxu0 0.0
    %466 = vmatpush1.msra.mxu0 0.0
    %467 = vmatprep.subr.mxu0 0.0
    %468 = vmatpush1.msra.mxu0 0.0
    %469 = vmatprep.subr.mxu0 0.0
    %470 = vmatpush1.msra.mxu0 0.0
    %471 = vmatprep.subr.mxu0 0.0
    %472 = vmatpush1.msra.mxu0 %v104
    %473 = vmatprep.subr.mxu0 0.0
    %474 = vmatpush1.msra.mxu0 %v103
    %475 = vmatprep.subr.mxu0 0.0
    %476 = vmatpush1.msra.mxu0 %v102
    %477 = vmatprep.subr.mxu0 0.0
    %478 = vmatpush1.msra.mxu0 %v101
    %479 = vmatprep.subr.mxu0 0.0
    %480 = vmatpush2.msra.mxu0 0.0
    %481 = vmatprep.subr.mxu0 0.0
    %482 = vmatpush2.msra.mxu0 0.0
    %483 = vmatprep.subr.mxu0 0.0
    %484 = vmatpush2.msra.mxu0 0.0
    %485 = vmatprep.subr.mxu0 0.0
    %486 = vmatpush2.msra.mxu0 0.0
    %487 = vmatprep.subr.mxu0 0.0
    %488 = vmatpush2.msra.mxu0 0.0
    %489 = vmatprep.subr.mxu0 0.0
    %490 = vmatpush2.msra.mxu0 0.0
    %491 = vmatprep.subr.mxu0 0.0
    %492 = vmatpush2.msra.mxu0 0.0
    %493 = vmatprep.subr.mxu0 0.0
    %494 = vmatpush2.msra.mxu0 0.0
    %495 = vmatprep.subr.mxu0 0.0
    %496 = vmatpush2.msra.mxu0 0.0
    %497 = vmatprep.subr.mxu0 0.0
    %498 = vmatpush2.msra.mxu0 0.0
    %499 = vmatprep.subr.mxu0 0.0
    %500 = vmatpush2.msra.mxu0 0.0
    %501 = vmatprep.subr.mxu0 0.0
    %502 = vmatpush2.msra.mxu0 0.0
    %503 = vmatprep.subr.mxu0 0.0
    %504 = vmatpush2.msra.mxu0 0.0
    %505 = vmatprep.subr.mxu0 0.0
    %506 = vmatpush2.msra.mxu0 0.0
    %507 = vmatprep.subr.mxu0 0.0
    %508 = vmatpush2.msra.mxu0 0.0
    %509 = vmatprep.subr.mxu0 0.0
    %510 = vmatpush2.msra.mxu0 0.0
    %511 = vmatprep.mubr.f32.mxu0 0.0
    %512 = vmatmul.mubr.f32.gmra.mxu0 %v445
    %v513 = vpop.f32.mrf.mxu0
    %v514 = vadd.f32 %v140, %v513
    %v515 = vpop.f32.mrf.mxu0
    %516 = vdwg.mxu0
    %v518 = vsel %vm151, %v84, 0
    %520 = vmatprep.subr.mxu0 0.0
    %521 = vmatpush1.msra.mxu0 0.0
    %522 = vmatprep.subr.mxu0 0.0
    %523 = vmatpush1.msra.mxu0 0.0
    %524 = vmatprep.subr.mxu0 0.0
    %525 = vmatpush1.msra.mxu0 0.0
    %526 = vmatprep.subr.mxu0 0.0
    %527 = vmatpush1.msra.mxu0 0.0
    %528 = vmatprep.subr.mxu0 0.0
    %529 = vmatpush1.msra.mxu0 0.0
    %530 = vmatprep.subr.mxu0 0.0
    %531 = vmatpush1.msra.mxu0 0.0
    %532 = vmatprep.subr.mxu0 0.0
    %533 = vmatpush1.msra.mxu0 0.0
    %534 = vmatprep.subr.mxu0 0.0
    %535 = vmatpush1.msra.mxu0 0.0
    %536 = vmatprep.subr.mxu0 0.0
    %537 = vmatpush1.msra.mxu0 0.0
    %538 = vmatprep.subr.mxu0 0.0
    %539 = vmatpush1.msra.mxu0 0.0
    %540 = vmatprep.subr.mxu0 0.0
    %541 = vmatpush1.msra.mxu0 0.0
    %542 = vmatprep.subr.mxu0 0.0
    %543 = vmatpush1.msra.mxu0 0.0
    %544 = vmatprep.subr.mxu0 0.0
    %545 = vmatpush1.msra.mxu0 %v108
    %546 = vmatprep.subr.mxu0 0.0
    %547 = vmatpush1.msra.mxu0 %v107
    %548 = vmatprep.subr.mxu0 0.0
    %549 = vmatpush1.msra.mxu0 %v106
    %550 = vmatprep.subr.mxu0 0.0
    %551 = vmatpush1.msra.mxu0 %v105
    %552 = vmatprep.subr.mxu0 0.0
    %553 = vmatpush2.msra.mxu0 0.0
    %554 = vmatprep.subr.mxu0 0.0
    %555 = vmatpush2.msra.mxu0 0.0
    %556 = vmatprep.subr.mxu0 0.0
    %557 = vmatpush2.msra.mxu0 0.0
    %558 = vmatprep.subr.mxu0 0.0
    %559 = vmatpush2.msra.mxu0 0.0
    %560 = vmatprep.subr.mxu0 0.0
    %561 = vmatpush2.msra.mxu0 0.0
    %562 = vmatprep.subr.mxu0 0.0
    %563 = vmatpush2.msra.mxu0 0.0
    %564 = vmatprep.subr.mxu0 0.0
    %565 = vmatpush2.msra.mxu0 0.0
    %566 = vmatprep.subr.mxu0 0.0
    %567 = vmatpush2.msra.mxu0 0.0
    %568 = vmatprep.subr.mxu0 0.0
    %569 = vmatpush2.msra.mxu0 0.0
    %570 = vmatprep.subr.mxu0 0.0
    %571 = vmatpush2.msra.mxu0 0.0
    %572 = vmatprep.subr.mxu0 0.0
    %573 = vmatpush2.msra.mxu0 0.0
    %574 = vmatprep.subr.mxu0 0.0
    %575 = vmatpush2.msra.mxu0 0.0
    %576 = vmatprep.subr.mxu0 0.0
    %577 = vmatpush2.msra.mxu0 0.0
    %578 = vmatprep.subr.mxu0 0.0
    %579 = vmatpush2.msra.mxu0 0.0
    %580 = vmatprep.subr.mxu0 0.0
    %581 = vmatpush2.msra.mxu0 0.0
    %582 = vmatprep.subr.mxu0 0.0
    %583 = vmatpush2.msra.mxu0 0.0
    %584 = vmatprep.mubr.f32.mxu0 0.0
    %585 = vmatmul.mubr.f32.gmra.mxu0 %v518
    %v586 = vpop.f32.mrf.mxu0
    %v587 = vadd.f32 %v144, %v586
    %v588 = vpop.f32.mrf.mxu0
    %589 = vdwg.mxu0
    %v590 = vld [vmem:[#allocation8] sm:$0xff]
    %v591 = vld [vmem:[#allocation8 + $0x8] sm:$0xff]
    %v592 = vld [vmem:[#allocation8 + $0x10] sm:$0xff]
    %v593 = vld [vmem:[#allocation8 + $0x18] sm:$0xff]
    %vm594 = vcmask 64512
    %v596 = vsel %vm594, %v222, 0
    %v599 = vsel %vm594, %v368, 0
    %601 = vmatprep.subr.mxu0 0.0
    %602 = vmatpush1.xpose.msra.mxu0 0.0
    %603 = vmatprep.subr.mxu0 0.0
    %604 = vmatpush1.xpose.msra.mxu0 0.0
    %605 = vmatprep.subr.mxu0 0.0
    %606 = vmatpush1.xpose.msra.mxu0 0.0
    %607 = vmatprep.subr.mxu0 0.0
    %608 = vmatpush1.xpose.msra.mxu0 0.0
    %609 = vmatprep.subr.mxu0 0.0
    %610 = vmatpush1.xpose.msra.mxu0 0.0
    %611 = vmatprep.subr.mxu0 0.0
    %612 = vmatpush1.xpose.msra.mxu0 0.0
    %613 = vmatprep.subr.mxu0 0.0
    %614 = vmatpush1.xpose.msra.mxu0 0.0
    %615 = vmatprep.subr.mxu0 0.0
    %616 = vmatpush1.xpose.msra.mxu0 0.0
    %617 = vmatprep.subr.mxu0 0.0
    %618 = vmatpush1.xpose.msra.mxu0 0.0
    %619 = vmatprep.subr.mxu0 0.0
    %620 = vmatpush1.xpose.msra.mxu0 0.0
    %621 = vmatprep.subr.mxu0 0.0
    %622 = vmatpush1.xpose.msra.mxu0 0.0
    %623 = vmatprep.subr.mxu0 0.0
    %624 = vmatpush1.xpose.msra.mxu0 0.0
    %625 = vmatprep.subr.mxu0 0.0
    %626 = vmatpush1.xpose.msra.mxu0 0.0
    %627 = vmatprep.subr.mxu0 0.0
    %628 = vmatpush1.xpose.msra.mxu0 0.0
    %629 = vmatprep.subr.mxu0 0.0
    %630 = vmatpush1.xpose.msra.mxu0 0.0
    %631 = vmatprep.subr.mxu0 0.0
    %632 = vmatpush1.xpose.msra.mxu0 %v599
    %633 = vmatprep.subr.mxu0 0.0
    %634 = vmatpush2.xpose.msra.mxu0 0.0
    %635 = vmatprep.subr.mxu0 0.0
    %636 = vmatpush2.xpose.msra.mxu0 0.0
    %637 = vmatprep.subr.mxu0 0.0
    %638 = vmatpush2.xpose.msra.mxu0 0.0
    %639 = vmatprep.subr.mxu0 0.0
    %640 = vmatpush2.xpose.msra.mxu0 0.0
    %641 = vmatprep.subr.mxu0 0.0
    %642 = vmatpush2.xpose.msra.mxu0 0.0
    %643 = vmatprep.subr.mxu0 0.0
    %644 = vmatpush2.xpose.msra.mxu0 0.0
    %645 = vmatprep.subr.mxu0 0.0
    %646 = vmatpush2.xpose.msra.mxu0 0.0
    %647 = vmatprep.subr.mxu0 0.0
    %648 = vmatpush2.xpose.msra.mxu0 0.0
    %649 = vmatprep.subr.mxu0 0.0
    %650 = vmatpush2.xpose.msra.mxu0 0.0
    %651 = vmatprep.subr.mxu0 0.0
    %652 = vmatpush2.xpose.msra.mxu0 0.0
    %653 = vmatprep.subr.mxu0 0.0
    %654 = vmatpush2.xpose.msra.mxu0 0.0
    %655 = vmatprep.subr.mxu0 0.0
    %656 = vmatpush2.xpose.msra.mxu0 0.0
    %657 = vmatprep.subr.mxu0 0.0
    %658 = vmatpush2.xpose.msra.mxu0 0.0
    %659 = vmatprep.subr.mxu0 0.0
    %660 = vmatpush2.xpose.msra.mxu0 0.0
    %661 = vmatprep.subr.mxu0 0.0
    %662 = vmatpush2.xpose.msra.mxu0 0.0
    %663 = vmatprep.subr.mxu0 0.0
    %664 = vmatpush2.xpose.msra.mxu0 0.0
    %665 = vmatprep.mubr.f32.mxu0 0.0
    %666 = vmatmul.mubr.f32.gmra.mxu0 %v596
    %v667 = vpop.f32.mrf.mxu0
    %v668 = vadd.f32 0.0, %v667
    %v669 = vpop.f32.mrf.mxu0
    %670 = vdwg.mxu0
    %v672 = vsel %vm594, %v295, 0
    %v675 = vsel %vm594, %v441, 0
    %677 = vmatprep.subr.mxu0 0.0
    %678 = vmatpush1.xpose.msra.mxu0 0.0
    %679 = vmatprep.subr.mxu0 0.0
    %680 = vmatpush1.xpose.msra.mxu0 0.0
    %681 = vmatprep.subr.mxu0 0.0
    %682 = vmatpush1.xpose.msra.mxu0 0.0
    %683 = vmatprep.subr.mxu0 0.0
    %684 = vmatpush1.xpose.msra.mxu0 0.0
    %685 = vmatprep.subr.mxu0 0.0
    %686 = vmatpush1.xpose.msra.mxu0 0.0
    %687 = vmatprep.subr.mxu0 0.0
    %688 = vmatpush1.xpose.msra.mxu0 0.0
    %689 = vmatprep.subr.mxu0 0.0
    %690 = vmatpush1.xpose.msra.mxu0 0.0
    %691 = vmatprep.subr.mxu0 0.0
    %692 = vmatpush1.xpose.msra.mxu0 0.0
    %693 = vmatprep.subr.mxu0 0.0
    %694 = vmatpush1.xpose.msra.mxu0 0.0
    %695 = vmatprep.subr.mxu0 0.0
    %696 = vmatpush1.xpose.msra.mxu0 0.0
    %697 = vmatprep.subr.mxu0 0.0
    %698 = vmatpush1.xpose.msra.mxu0 0.0
    %699 = vmatprep.subr.mxu0 0.0
    %700 = vmatpush1.xpose.msra.mxu0 0.0
    %701 = vmatprep.subr.mxu0 0.0
    %702 = vmatpush1.xpose.msra.mxu0 0.0
    %703 = vmatprep.subr.mxu0 0.0
    %704 = vmatpush1.xpose.msra.mxu0 0.0
    %705 = vmatprep.subr.mxu0 0.0
    %706 = vmatpush1.xpose.msra.mxu0 0.0
    %707 = vmatprep.subr.mxu0 0.0
    %708 = vmatpush1.xpose.msra.mxu0 %v675
    %709 = vmatprep.subr.mxu0 0.0
    %710 = vmatpush2.xpose.msra.mxu0 0.0
    %711 = vmatprep.subr.mxu0 0.0
    %712 = vmatpush2.xpose.msra.mxu0 0.0
    %713 = vmatprep.subr.mxu0 0.0
    %714 = vmatpush2.xpose.msra.mxu0 0.0
    %715 = vmatprep.subr.mxu0 0.0
    %716 = vmatpush2.xpose.msra.mxu0 0.0
    %717 = vmatprep.subr.mxu0 0.0
    %718 = vmatpush2.xpose.msra.mxu0 0.0
    %719 = vmatprep.subr.mxu0 0.0
    %720 = vmatpush2.xpose.msra.mxu0 0.0
    %721 = vmatprep.subr.mxu0 0.0
    %722 = vmatpush2.xpose.msra.mxu0 0.0
    %723 = vmatprep.subr.mxu0 0.0
    %724 = vmatpush2.xpose.msra.mxu0 0.0
    %725 = vmatprep.subr.mxu0 0.0
    %726 = vmatpush2.xpose.msra.mxu0 0.0
    %727 = vmatprep.subr.mxu0 0.0
    %728 = vmatpush2.xpose.msra.mxu0 0.0
    %729 = vmatprep.subr.mxu0 0.0
    %730 = vmatpush2.xpose.msra.mxu0 0.0
    %731 = vmatprep.subr.mxu0 0.0
    %732 = vmatpush2.xpose.msra.mxu0 0.0
    %733 = vmatprep.subr.mxu0 0.0
    %734 = vmatpush2.xpose.msra.mxu0 0.0
    %735 = vmatprep.subr.mxu0 0.0
    %736 = vmatpush2.xpose.msra.mxu0 0.0
    %737 = vmatprep.subr.mxu0 0.0
    %738 = vmatpush2.xpose.msra.mxu0 0.0
    %739 = vmatprep.subr.mxu0 0.0
    %740 = vmatpush2.xpose.msra.mxu0 0.0
    %741 = vmatprep.mubr.f32.mxu0 0.0
    %742 = vmatmul.mubr.f32.gmra.mxu0 %v672
    %v743 = vpop.f32.mrf.mxu0
    %v744 = vadd.f32 0.0, %v743
    %v745 = vpop.f32.mrf.mxu0
    %746 = vdwg.mxu0
    %v747 = vsel %vm594, %v668, -inf
    %748 = vmax.xlane.f32.xlu0 %v747
    %v749 = vpop.xlane.xlu0 %748
    %v750 = vsel %vm594, %v744, -inf
    %751 = vmax.xlane.f32.xlu0 %v750
    %v752 = vpop.xlane.xlu0 %751
    %v753 = vsub.f32 %v668, %v749
    %v754 = vsub.f32 %v744, %v752
    %v755 = vmul.f32 %v753, 1.442695
    %v756 = vpow.pop %v755
    %v757 = vmul.f32 %v754, 1.442695
    %v758 = vpow.pop %v757
    %v759 = vsel %vm594, %v756, 0.0
    %760 = vadd.xlane.f32.xlu0 %v759
    %v761 = vpop.xlane.xlu0 %760
    %v762 = vsel %vm594, %v758, 0.0
    %763 = vadd.xlane.f32.xlu0 %v762
    %v764 = vpop.xlane.xlu0 %763
    %v765 = vrcp.pop %v761
    %v766 = vrcp.pop %v764
    %v767 = vmul.f32 %v756, %v765
    %v768 = vmul.f32 %v758, %v766
    %769 = vst.msk [vmem:[#allocation11] sm:$0xff] %vm594, %v767
    %770 = vst.msk [vmem:[#allocation11 + $0x8] sm:$0xff] %vm594, %v768
    %v772 = vsel %vm594, %v767, 0
    %774 = vmatprep.subr.mxu0 0.0
    %775 = vmatpush1.msra.mxu0 0.0
    %776 = vmatprep.subr.mxu0 0.0
    %777 = vmatpush1.msra.mxu0 0.0
    %778 = vmatprep.subr.mxu0 0.0
    %779 = vmatpush1.msra.mxu0 0.0
    %780 = vmatprep.subr.mxu0 0.0
    %781 = vmatpush1.msra.mxu0 0.0
    %782 = vmatprep.subr.mxu0 0.0
    %783 = vmatpush1.msra.mxu0 0.0
    %784 = vmatprep.subr.mxu0 0.0
    %785 = vmatpush1.msra.mxu0 0.0
    %786 = vmatprep.subr.mxu0 0.0
    %787 = vmatpush1.msra.mxu0 0.0
    %788 = vmatprep.subr.mxu0 0.0
    %789 = vmatpush1.msra.mxu0 0.0
    %790 = vmatprep.subr.mxu0 0.0
    %791 = vmatpush1.msra.mxu0 0.0
    %792 = vmatprep.subr.mxu0 0.0
    %793 = vmatpush1.msra.mxu0 0.0
    %794 = vmatprep.subr.mxu0 0.0
    %795 = vmatpush1.msra.mxu0 0.0
    %796 = vmatprep.subr.mxu0 0.0
    %797 = vmatpush1.msra.mxu0 0.0
    %798 = vmatprep.subr.mxu0 0.0
    %799 = vmatpush1.msra.mxu0 0.0
    %800 = vmatprep.subr.mxu0 0.0
    %801 = vmatpush1.msra.mxu0 0.0
    %802 = vmatprep.subr.mxu0 0.0
    %803 = vmatpush1.msra.mxu0 0.0
    %804 = vmatprep.subr.mxu0 0.0
    %805 = vmatpush1.msra.mxu0 %v514
    %806 = vmatprep.subr.mxu0 0.0
    %807 = vmatpush2.msra.mxu0 0.0
    %808 = vmatprep.subr.mxu0 0.0
    %809 = vmatpush2.msra.mxu0 0.0
    %810 = vmatprep.subr.mxu0 0.0
    %811 = vmatpush2.msra.mxu0 0.0
    %812 = vmatprep.subr.mxu0 0.0
    %813 = vmatpush2.msra.mxu0 0.0
    %814 = vmatprep.subr.mxu0 0.0
    %815 = vmatpush2.msra.mxu0 0.0
    %816 = vmatprep.subr.mxu0 0.0
    %817 = vmatpush2.msra.mxu0 0.0
    %818 = vmatprep.subr.mxu0 0.0
    %819 = vmatpush2.msra.mxu0 0.0
    %820 = vmatprep.subr.mxu0 0.0
    %821 = vmatpush2.msra.mxu0 0.0
    %822 = vmatprep.subr.mxu0 0.0
    %823 = vmatpush2.msra.mxu0 0.0
    %824 = vmatprep.subr.mxu0 0.0
    %825 = vmatpush2.msra.mxu0 0.0
    %826 = vmatprep.subr.mxu0 0.0
    %827 = vmatpush2.msra.mxu0 0.0
    %828 = vmatprep.subr.mxu0 0.0
    %829 = vmatpush2.msra.mxu0 0.0
    %830 = vmatprep.subr.mxu0 0.0
    %831 = vmatpush2.msra.mxu0 0.0
    %832 = vmatprep.subr.mxu0 0.0
    %833 = vmatpush2.msra.mxu0 0.0
    %834 = vmatprep.subr.mxu0 0.0
    %835 = vmatpush2.msra.mxu0 0.0
    %836 = vmatprep.subr.mxu0 0.0
    %837 = vmatpush2.msra.mxu0 0.0
    %838 = vmatprep.mubr.f32.mxu0 0.0
    %839 = vmatmul.mubr.f32.gmra.mxu0 %v772
    %v840 = vpop.f32.mrf.mxu0
    %v841 = vadd.f32 0.0, %v840
    %v842 = vpop.f32.mrf.mxu0
    %843 = vdwg.mxu0
    %v845 = vsel %vm594, %v768, 0
    %847 = vmatprep.subr.mxu0 0.0
    %848 = vmatpush1.msra.mxu0 0.0
    %849 = vmatprep.subr.mxu0 0.0
    %850 = vmatpush1.msra.mxu0 0.0
    %851 = vmatprep.subr.mxu0 0.0
    %852 = vmatpush1.msra.mxu0 0.0
    %853 = vmatprep.subr.mxu0 0.0
    %854 = vmatpush1.msra.mxu0 0.0
    %855 = vmatprep.subr.mxu0 0.0
    %856 = vmatpush1.msra.mxu0 0.0
    %857 = vmatprep.subr.mxu0 0.0
    %858 = vmatpush1.msra.mxu0 0.0
    %859 = vmatprep.subr.mxu0 0.0
    %860 = vmatpush1.msra.mxu0 0.0
    %861 = vmatprep.subr.mxu0 0.0
    %862 = vmatpush1.msra.mxu0 0.0
    %863 = vmatprep.subr.mxu0 0.0
    %864 = vmatpush1.msra.mxu0 0.0
    %865 = vmatprep.subr.mxu0 0.0
    %866 = vmatpush1.msra.mxu0 0.0
    %867 = vmatprep.subr.mxu0 0.0
    %868 = vmatpush1.msra.mxu0 0.0
    %869 = vmatprep.subr.mxu0 0.0
    %870 = vmatpush1.msra.mxu0 0.0
    %871 = vmatprep.subr.mxu0 0.0
    %872 = vmatpush1.msra.mxu0 0.0
    %873 = vmatprep.subr.mxu0 0.0
    %874 = vmatpush1.msra.mxu0 0.0
    %875 = vmatprep.subr.mxu0 0.0
    %876 = vmatpush1.msra.mxu0 0.0
    %877 = vmatprep.subr.mxu0 0.0
    %878 = vmatpush1.msra.mxu0 %v587
    %879 = vmatprep.subr.mxu0 0.0
    %880 = vmatpush2.msra.mxu0 0.0
    %881 = vmatprep.subr.mxu0 0.0
    %882 = vmatpush2.msra.mxu0 0.0
    %883 = vmatprep.subr.mxu0 0.0
    %884 = vmatpush2.msra.mxu0 0.0
    %885 = vmatprep.subr.mxu0 0.0
    %886 = vmatpush2.msra.mxu0 0.0
    %887 = vmatprep.subr.mxu0 0.0
    %888 = vmatpush2.msra.mxu0 0.0
    %889 = vmatprep.subr.mxu0 0.0
    %890 = vmatpush2.msra.mxu0 0.0
    %891 = vmatprep.subr.mxu0 0.0
    %892 = vmatpush2.msra.mxu0 0.0
    %893 = vmatprep.subr.mxu0 0.0
    %894 = vmatpush2.msra.mxu0 0.0
    %895 = vmatprep.subr.mxu0 0.0
    %896 = vmatpush2.msra.mxu0 0.0
    %897 = vmatprep.subr.mxu0 0.0
    %898 = vmatpush2.msra.mxu0 0.0
    %899 = vmatprep.subr.mxu0 0.0
    %900 = vmatpush2.msra.mxu0 0.0
    %901 = vmatprep.subr.mxu0 0.0
    %902 = vmatpush2.msra.mxu0 0.0
    %903 = vmatprep.subr.mxu0 0.0
    %904 = vmatpush2.msra.mxu0 0.0
    %905 = vmatprep.subr.mxu0 0.0
    %906 = vmatpush2.msra.mxu0 0.0
    %907 = vmatprep.subr.mxu0 0.0
    %908 = vmatpush2.msra.mxu0 0.0
    %909 = vmatprep.subr.mxu0 0.0
    %910 = vmatpush2.msra.mxu0 0.0
    %911 = vmatprep.mubr.f32.mxu0 0.0
    %912 = vmatmul.mubr.f32.gmra.mxu0 %v845
    %v913 = vpop.f32.mrf.mxu0
    %v914 = vadd.f32 0.0, %v913
    %v915 = vpop.f32.mrf.mxu0
    %916 = vdwg.mxu0
    %917 = vrot.lane.b32.xlu0 %v222, 120
    %v918 = vpop.permute.xlu0 %917
    %919 = vrot.lane.b32.xlu0 %v368, 120
    %v920 = vpop.permute.xlu0 %919
    %v921 = vsel %vm594, %v918, 0
    %v923 = vsel %vm594, %v920, 0
    %925 = vmatprep.subr.mxu0 0.0
    %926 = vmatpush1.xpose.msra.mxu0 0.0
    %927 = vmatprep.subr.mxu0 0.0
    %928 = vmatpush1.xpose.msra.mxu0 0.0
    %929 = vmatprep.subr.mxu0 0.0
    %930 = vmatpush1.xpose.msra.mxu0 0.0
    %931 = vmatprep.subr.mxu0 0.0
    %932 = vmatpush1.xpose.msra.mxu0 0.0
    %933 = vmatprep.subr.mxu0 0.0
    %934 = vmatpush1.xpose.msra.mxu0 0.0
    %935 = vmatprep.subr.mxu0 0.0
    %936 = vmatpush1.xpose.msra.mxu0 0.0
    %937 = vmatprep.subr.mxu0 0.0
    %938 = vmatpush1.xpose.msra.mxu0 0.0
    %939 = vmatprep.subr.mxu0 0.0
    %940 = vmatpush1.xpose.msra.mxu0 0.0
    %941 = vmatprep.subr.mxu0 0.0
    %942 = vmatpush1.xpose.msra.mxu0 0.0
    %943 = vmatprep.subr.mxu0 0.0
    %944 = vmatpush1.xpose.msra.mxu0 0.0
    %945 = vmatprep.subr.mxu0 0.0
    %946 = vmatpush1.xpose.msra.mxu0 0.0
    %947 = vmatprep.subr.mxu0 0.0
    %948 = vmatpush1.xpose.msra.mxu0 0.0
    %949 = vmatprep.subr.mxu0 0.0
    %950 = vmatpush1.xpose.msra.mxu0 0.0
    %951 = vmatprep.subr.mxu0 0.0
    %952 = vmatpush1.xpose.msra.mxu0 0.0
    %953 = vmatprep.subr.mxu0 0.0
    %954 = vmatpush1.xpose.msra.mxu0 0.0
    %955 = vmatprep.subr.mxu0 0.0
    %956 = vmatpush1.xpose.msra.mxu0 %v923
    %957 = vmatprep.subr.mxu0 0.0
    %958 = vmatpush2.xpose.msra.mxu0 0.0
    %959 = vmatprep.subr.mxu0 0.0
    %960 = vmatpush2.xpose.msra.mxu0 0.0
    %961 = vmatprep.subr.mxu0 0.0
    %962 = vmatpush2.xpose.msra.mxu0 0.0
    %963 = vmatprep.subr.mxu0 0.0
    %964 = vmatpush2.xpose.msra.mxu0 0.0
    %965 = vmatprep.subr.mxu0 0.0
    %966 = vmatpush2.xpose.msra.mxu0 0.0
    %967 = vmatprep.subr.mxu0 0.0
    %968 = vmatpush2.xpose.msra.mxu0 0.0
    %969 = vmatprep.subr.mxu0 0.0
    %970 = vmatpush2.xpose.msra.mxu0 0.0
    %971 = vmatprep.subr.mxu0 0.0
    %972 = vmatpush2.xpose.msra.mxu0 0.0
    %973 = vmatprep.subr.mxu0 0.0
    %974 = vmatpush2.xpose.msra.mxu0 0.0
    %975 = vmatprep.subr.mxu0 0.0
    %976 = vmatpush2.xpose.msra.mxu0 0.0
    %977 = vmatprep.subr.mxu0 0.0
    %978 = vmatpush2.xpose.msra.mxu0 0.0
    %979 = vmatprep.subr.mxu0 0.0
    %980 = vmatpush2.xpose.msra.mxu0 0.0
    %981 = vmatprep.subr.mxu0 0.0
    %982 = vmatpush2.xpose.msra.mxu0 0.0
    %983 = vmatprep.subr.mxu0 0.0
    %984 = vmatpush2.xpose.msra.mxu0 0.0
    %985 = vmatprep.subr.mxu0 0.0
    %986 = vmatpush2.xpose.msra.mxu0 0.0
    %987 = vmatprep.subr.mxu0 0.0
    %988 = vmatpush2.xpose.msra.mxu0 0.0
    %989 = vmatprep.mubr.f32.mxu0 0.0
    %990 = vmatmul.mubr.f32.gmra.mxu0 %v921
    %v991 = vpop.f32.mrf.mxu0
    %v992 = vadd.f32 0.0, %v991
    %v993 = vpop.f32.mrf.mxu0
    %994 = vdwg.mxu0
    %995 = vrot.lane.b32.xlu0 %v295, 120
    %v996 = vpop.permute.xlu0 %995
    %997 = vrot.lane.b32.xlu0 %v441, 120
    %v998 = vpop.permute.xlu0 %997
    %v999 = vsel %vm594, %v996, 0
    %v1001 = vsel %vm594, %v998, 0
    %1003 = vmatprep.subr.mxu0 0.0
    %1004 = vmatpush1.xpose.msra.mxu0 0.0
    %1005 = vmatprep.subr.mxu0 0.0
    %1006 = vmatpush1.xpose.msra.mxu0 0.0
    %1007 = vmatprep.subr.mxu0 0.0
    %1008 = vmatpush1.xpose.msra.mxu0 0.0
    %1009 = vmatprep.subr.mxu0 0.0
    %1010 = vmatpush1.xpose.msra.mxu0 0.0
    %1011 = vmatprep.subr.mxu0 0.0
    %1012 = vmatpush1.xpose.msra.mxu0 0.0
    %1013 = vmatprep.subr.mxu0 0.0
    %1014 = vmatpush1.xpose.msra.mxu0 0.0
    %1015 = vmatprep.subr.mxu0 0.0
    %1016 = vmatpush1.xpose.msra.mxu0 0.0
    %1017 = vmatprep.subr.mxu0 0.0
    %1018 = vmatpush1.xpose.msra.mxu0 0.0
    %1019 = vmatprep.subr.mxu0 0.0
    %1020 = vmatpush1.xpose.msra.mxu0 0.0
    %1021 = vmatprep.subr.mxu0 0.0
    %1022 = vmatpush1.xpose.msra.mxu0 0.0
    %1023 = vmatprep.subr.mxu0 0.0
    %1024 = vmatpush1.xpose.msra.mxu0 0.0
    %1025 = vmatprep.subr.mxu0 0.0
    %1026 = vmatpush1.xpose.msra.mxu0 0.0
    %1027 = vmatprep.subr.mxu0 0.0
    %1028 = vmatpush1.xpose.msra.mxu0 0.0
    %1029 = vmatprep.subr.mxu0 0.0
    %1030 = vmatpush1.xpose.msra.mxu0 0.0
    %1031 = vmatprep.subr.mxu0 0.0
    %1032 = vmatpush1.xpose.msra.mxu0 0.0
    %1033 = vmatprep.subr.mxu0 0.0
    %1034 = vmatpush1.xpose.msra.mxu0 %v1001
    %1035 = vmatprep.subr.mxu0 0.0
    %1036 = vmatpush2.xpose.msra.mxu0 0.0
    %1037 = vmatprep.subr.mxu0 0.0
    %1038 = vmatpush2.xpose.msra.mxu0 0.0
    %1039 = vmatprep.subr.mxu0 0.0
    %1040 = vmatpush2.xpose.msra.mxu0 0.0
    %1041 = vmatprep.subr.mxu0 0.0
    %1042 = vmatpush2.xpose.msra.mxu0 0.0
    %1043 = vmatprep.subr.mxu0 0.0
    %1044 = vmatpush2.xpose.msra.mxu0 0.0
    %1045 = vmatprep.subr.mxu0 0.0
    %1046 = vmatpush2.xpose.msra.mxu0 0.0
    %1047 = vmatprep.subr.mxu0 0.0
    %1048 = vmatpush2.xpose.msra.mxu0 0.0
    %1049 = vmatprep.subr.mxu0 0.0
    %1050 = vmatpush2.xpose.msra.mxu0 0.0
    %1051 = vmatprep.subr.mxu0 0.0
    %1052 = vmatpush2.xpose.msra.mxu0 0.0
    %1053 = vmatprep.subr.mxu0 0.0
    %1054 = vmatpush2.xpose.msra.mxu0 0.0
    %1055 = vmatprep.subr.mxu0 0.0
    %1056 = vmatpush2.xpose.msra.mxu0 0.0
    %1057 = vmatprep.subr.mxu0 0.0
    %1058 = vmatpush2.xpose.msra.mxu0 0.0
    %1059 = vmatprep.subr.mxu0 0.0
    %1060 = vmatpush2.xpose.msra.mxu0 0.0
    %1061 = vmatprep.subr.mxu0 0.0
    %1062 = vmatpush2.xpose.msra.mxu0 0.0
    %1063 = vmatprep.subr.mxu0 0.0
    %1064 = vmatpush2.xpose.msra.mxu0 0.0
    %1065 = vmatprep.subr.mxu0 0.0
    %1066 = vmatpush2.xpose.msra.mxu0 0.0
    %1067 = vmatprep.mubr.f32.mxu0 0.0
    %1068 = vmatmul.mubr.f32.gmra.mxu0 %v999
    %v1069 = vpop.f32.mrf.mxu0
    %v1070 = vadd.f32 0.0, %v1069
    %v1071 = vpop.f32.mrf.mxu0
    %1072 = vdwg.mxu0
    %v1073 = vsel %vm594, %v992, -inf
    %1074 = vmax.xlane.f32.xlu0 %v1073
    %v1075 = vpop.xlane.xlu0 %1074
    %v1076 = vsel %vm594, %v1070, -inf
    %1077 = vmax.xlane.f32.xlu0 %v1076
    %v1078 = vpop.xlane.xlu0 %1077
    %v1079 = vsub.f32 %v992, %v1075
    %v1080 = vsub.f32 %v1070, %v1078
    %v1081 = vmul.f32 %v1079, 1.442695
    %v1082 = vpow.pop %v1081
    %v1083 = vmul.f32 %v1080, 1.442695
    %v1084 = vpow.pop %v1083
    %v1085 = vsel %vm594, %v1082, 0.0
    %1086 = vadd.xlane.f32.xlu0 %v1085
    %v1087 = vpop.xlane.xlu0 %1086
    %v1088 = vsel %vm594, %v1084, 0.0
    %1089 = vadd.xlane.f32.xlu0 %v1088
    %v1090 = vpop.xlane.xlu0 %1089
    %v1091 = vrcp.pop %v1087
    %v1092 = vrcp.pop %v1090
    %v1093 = vmul.f32 %v1082, %v1091
    %v1094 = vmul.f32 %v1084, %v1092
    %s1095 = scalar_lea.vmem [#allocation11], 16
    %1096 = vst.msk [vmem:[%s1095] sm:$0xff] %vm594, %v1093
    %1097 = vst.msk [vmem:[%s1095 + $0x8] sm:$0xff] %vm594, %v1094
    %1099 = vrot.lane.b32.xlu0 %v514, 120
    %v1100 = vpop.permute.xlu0 %1099
    %v1103 = vsel %vm594, %v1093, 0
    %1105 = vmatprep.subr.mxu0 0.0
    %1106 = vmatpush1.msra.mxu0 0.0
    %1107 = vmatprep.subr.mxu0 0.0
    %1108 = vmatpush1.msra.mxu0 0.0
    %1109 = vmatprep.subr.mxu0 0.0
    %1110 = vmatpush1.msra.mxu0 0.0
    %1111 = vmatprep.subr.mxu0 0.0
    %1112 = vmatpush1.msra.mxu0 0.0
    %1113 = vmatprep.subr.mxu0 0.0
    %1114 = vmatpush1.msra.mxu0 0.0
    %1115 = vmatprep.subr.mxu0 0.0
    %1116 = vmatpush1.msra.mxu0 0.0
    %1117 = vmatprep.subr.mxu0 0.0
    %1118 = vmatpush1.msra.mxu0 0.0
    %1119 = vmatprep.subr.mxu0 0.0
    %1120 = vmatpush1.msra.mxu0 0.0
    %1121 = vmatprep.subr.mxu0 0.0
    %1122 = vmatpush1.msra.mxu0 0.0
    %1123 = vmatprep.subr.mxu0 0.0
    %1124 = vmatpush1.msra.mxu0 0.0
    %1125 = vmatprep.subr.mxu0 0.0
    %1126 = vmatpush1.msra.mxu0 0.0
    %1127 = vmatprep.subr.mxu0 0.0
    %1128 = vmatpush1.msra.mxu0 0.0
    %1129 = vmatprep.subr.mxu0 0.0
    %1130 = vmatpush1.msra.mxu0 0.0
    %1131 = vmatprep.subr.mxu0 0.0
    %1132 = vmatpush1.msra.mxu0 0.0
    %1133 = vmatprep.subr.mxu0 0.0
    %1134 = vmatpush1.msra.mxu0 0.0
    %1135 = vmatprep.subr.mxu0 0.0
    %1136 = vmatpush1.msra.mxu0 %v1100
    %1137 = vmatprep.subr.mxu0 0.0
    %1138 = vmatpush2.msra.mxu0 0.0
    %1139 = vmatprep.subr.mxu0 0.0
    %1140 = vmatpush2.msra.mxu0 0.0
    %1141 = vmatprep.subr.mxu0 0.0
    %1142 = vmatpush2.msra.mxu0 0.0
    %1143 = vmatprep.subr.mxu0 0.0
    %1144 = vmatpush2.msra.mxu0 0.0
    %1145 = vmatprep.subr.mxu0 0.0
    %1146 = vmatpush2.msra.mxu0 0.0
    %1147 = vmatprep.subr.mxu0 0.0
    %1148 = vmatpush2.msra.mxu0 0.0
    %1149 = vmatprep.subr.mxu0 0.0
    %1150 = vmatpush2.msra.mxu0 0.0
    %1151 = vmatprep.subr.mxu0 0.0
    %1152 = vmatpush2.msra.mxu0 0.0
    %1153 = vmatprep.subr.mxu0 0.0
    %1154 = vmatpush2.msra.mxu0 0.0
    %1155 = vmatprep.subr.mxu0 0.0
    %1156 = vmatpush2.msra.mxu0 0.0
    %1157 = vmatprep.subr.mxu0 0.0
    %1158 = vmatpush2.msra.mxu0 0.0
    %1159 = vmatprep.subr.mxu0 0.0
    %1160 = vmatpush2.msra.mxu0 0.0
    %1161 = vmatprep.subr.mxu0 0.0
    %1162 = vmatpush2.msra.mxu0 0.0
    %1163 = vmatprep.subr.mxu0 0.0
    %1164 = vmatpush2.msra.mxu0 0.0
    %1165 = vmatprep.subr.mxu0 0.0
    %1166 = vmatpush2.msra.mxu0 0.0
    %1167 = vmatprep.subr.mxu0 0.0
    %1168 = vmatpush2.msra.mxu0 0.0
    %1169 = vmatprep.mubr.f32.mxu0 0.0
    %1170 = vmatmul.mubr.f32.gmra.mxu0 %v1103
    %v1171 = vpop.f32.mrf.mxu0
    %v1172 = vadd.f32 0.0, %v1171
    %v1173 = vpop.f32.mrf.mxu0
    %1174 = vdwg.mxu0
    %1176 = vrot.lane.b32.xlu0 %v587, 120
    %v1177 = vpop.permute.xlu0 %1176
    %v1180 = vsel %vm594, %v1094, 0
    %1182 = vmatprep.subr.mxu0 0.0
    %1183 = vmatpush1.msra.mxu0 0.0
    %1184 = vmatprep.subr.mxu0 0.0
    %1185 = vmatpush1.msra.mxu0 0.0
    %1186 = vmatprep.subr.mxu0 0.0
    %1187 = vmatpush1.msra.mxu0 0.0
    %1188 = vmatprep.subr.mxu0 0.0
    %1189 = vmatpush1.msra.mxu0 0.0
    %1190 = vmatprep.subr.mxu0 0.0
    %1191 = vmatpush1.msra.mxu0 0.0
    %1192 = vmatprep.subr.mxu0 0.0
    %1193 = vmatpush1.msra.mxu0 0.0
    %1194 = vmatprep.subr.mxu0 0.0
    %1195 = vmatpush1.msra.mxu0 0.0
    %1196 = vmatprep.subr.mxu0 0.0
    %1197 = vmatpush1.msra.mxu0 0.0
    %1198 = vmatprep.subr.mxu0 0.0
    %1199 = vmatpush1.msra.mxu0 0.0
    %1200 = vmatprep.subr.mxu0 0.0
    %1201 = vmatpush1.msra.mxu0 0.0
    %1202 = vmatprep.subr.mxu0 0.0
    %1203 = vmatpush1.msra.mxu0 0.0
    %1204 = vmatprep.subr.mxu0 0.0
    %1205 = vmatpush1.msra.mxu0 0.0
    %1206 = vmatprep.subr.mxu0 0.0
    %1207 = vmatpush1.msra.mxu0 0.0
    %1208 = vmatprep.subr.mxu0 0.0
    %1209 = vmatpush1.msra.mxu0 0.0
    %1210 = vmatprep.subr.mxu0 0.0
    %1211 = vmatpush1.msra.mxu0 0.0
    %1212 = vmatprep.subr.mxu0 0.0
    %1213 = vmatpush1.msra.mxu0 %v1177
    %1214 = vmatprep.subr.mxu0 0.0
    %1215 = vmatpush2.msra.mxu0 0.0
    %1216 = vmatprep.subr.mxu0 0.0
    %1217 = vmatpush2.msra.mxu0 0.0
    %1218 = vmatprep.subr.mxu0 0.0
    %1219 = vmatpush2.msra.mxu0 0.0
    %1220 = vmatprep.subr.mxu0 0.0
    %1221 = vmatpush2.msra.mxu0 0.0
    %1222 = vmatprep.subr.mxu0 0.0
    %1223 = vmatpush2.msra.mxu0 0.0
    %1224 = vmatprep.subr.mxu0 0.0
    %1225 = vmatpush2.msra.mxu0 0.0
    %1226 = vmatprep.subr.mxu0 0.0
    %1227 = vmatpush2.msra.mxu0 0.0
    %1228 = vmatprep.subr.mxu0 0.0
    %1229 = vmatpush2.msra.mxu0 0.0
    %1230 = vmatprep.subr.mxu0 0.0
    %1231 = vmatpush2.msra.mxu0 0.0
    %1232 = vmatprep.subr.mxu0 0.0
    %1233 = vmatpush2.msra.mxu0 0.0
    %1234 = vmatprep.subr.mxu0 0.0
    %1235 = vmatpush2.msra.mxu0 0.0
    %1236 = vmatprep.subr.mxu0 0.0
    %1237 = vmatpush2.msra.mxu0 0.0
    %1238 = vmatprep.subr.mxu0 0.0
    %1239 = vmatpush2.msra.mxu0 0.0
    %1240 = vmatprep.subr.mxu0 0.0
    %1241 = vmatpush2.msra.mxu0 0.0
    %1242 = vmatprep.subr.mxu0 0.0
    %1243 = vmatpush2.msra.mxu0 0.0
    %1244 = vmatprep.subr.mxu0 0.0
    %1245 = vmatpush2.msra.mxu0 0.0
    %1246 = vmatprep.mubr.f32.mxu0 0.0
    %1247 = vmatmul.mubr.f32.gmra.mxu0 %v1180
    %v1248 = vpop.f32.mrf.mxu0
    %v1249 = vadd.f32 0.0, %v1248
    %v1250 = vpop.f32.mrf.mxu0
    %1251 = vdwg.mxu0
    %v1253 = vsel %vm594, %v1172, 0
    %1255 = vmatprep.subr.mxu0 0.0
    %1256 = vmatpush1.msra.mxu0 0.0
    %1257 = vmatprep.subr.mxu0 0.0
    %1258 = vmatpush1.msra.mxu0 0.0
    %1259 = vmatprep.subr.mxu0 0.0
    %1260 = vmatpush1.msra.mxu0 0.0
    %1261 = vmatprep.subr.mxu0 0.0
    %1262 = vmatpush1.msra.mxu0 0.0
    %1263 = vmatprep.subr.mxu0 0.0
    %1264 = vmatpush1.msra.mxu0 0.0
    %1265 = vmatprep.subr.mxu0 0.0
    %1266 = vmatpush1.msra.mxu0 0.0
    %1267 = vmatprep.subr.mxu0 0.0
    %1268 = vmatpush1.msra.mxu0 0.0
    %1269 = vmatprep.subr.mxu0 0.0
    %1270 = vmatpush1.msra.mxu0 0.0
    %1271 = vmatprep.subr.mxu0 0.0
    %1272 = vmatpush1.msra.mxu0 0.0
    %1273 = vmatprep.subr.mxu0 0.0
    %1274 = vmatpush1.msra.mxu0 0.0
    %1275 = vmatprep.subr.mxu0 0.0
    %1276 = vmatpush1.msra.mxu0 0.0
    %1277 = vmatprep.subr.mxu0 0.0
    %1278 = vmatpush1.msra.mxu0 0.0
    %1279 = vmatprep.subr.mxu0 0.0
    %1280 = vmatpush1.msra.mxu0 0.0
    %1281 = vmatprep.subr.mxu0 0.0
    %1282 = vmatpush1.msra.mxu0 0.0
    %1283 = vmatprep.subr.mxu0 0.0
    %1284 = vmatpush1.msra.mxu0 0.0
    %1285 = vmatprep.subr.mxu0 0.0
    %1286 = vmatpush1.msra.mxu0 %v591
    %1287 = vmatprep.subr.mxu0 0.0
    %1288 = vmatpush2.msra.mxu0 0.0
    %1289 = vmatprep.subr.mxu0 0.0
    %1290 = vmatpush2.msra.mxu0 0.0
    %1291 = vmatprep.subr.mxu0 0.0
    %1292 = vmatpush2.msra.mxu0 0.0
    %1293 = vmatprep.subr.mxu0 0.0
    %1294 = vmatpush2.msra.mxu0 0.0
    %1295 = vmatprep.subr.mxu0 0.0
    %1296 = vmatpush2.msra.mxu0 0.0
    %1297 = vmatprep.subr.mxu0 0.0
    %1298 = vmatpush2.msra.mxu0 0.0
    %1299 = vmatprep.subr.mxu0 0.0
    %1300 = vmatpush2.msra.mxu0 0.0
    %1301 = vmatprep.subr.mxu0 0.0
    %1302 = vmatpush2.msra.mxu0 0.0
    %1303 = vmatprep.subr.mxu0 0.0
    %1304 = vmatpush2.msra.mxu0 0.0
    %1305 = vmatprep.subr.mxu0 0.0
    %1306 = vmatpush2.msra.mxu0 0.0
    %1307 = vmatprep.subr.mxu0 0.0
    %1308 = vmatpush2.msra.mxu0 0.0
    %1309 = vmatprep.subr.mxu0 0.0
    %1310 = vmatpush2.msra.mxu0 0.0
    %1311 = vmatprep.subr.mxu0 0.0
    %1312 = vmatpush2.msra.mxu0 0.0
    %1313 = vmatprep.subr.mxu0 0.0
    %1314 = vmatpush2.msra.mxu0 0.0
    %1315 = vmatprep.subr.mxu0 0.0
    %1316 = vmatpush2.msra.mxu0 0.0
    %1317 = vmatprep.subr.mxu0 0.0
    %1318 = vmatpush2.msra.mxu0 0.0
    %1319 = vmatprep.mubr.f32.mxu0 0.0
    %1320 = vmatmul.mubr.f32.gmra.mxu0 %v1253
    %v1321 = vpop.f32.mrf.mxu0
    %v1322 = vadd.f32 0.0, %v1321
    %v1323 = vpop.f32.mrf.mxu0
    %1324 = vdwg.mxu0
    %v1326 = vsel %vm594, %v1249, 0
    %1328 = vmatprep.subr.mxu0 0.0
    %1329 = vmatpush1.msra.mxu0 0.0
    %1330 = vmatprep.subr.mxu0 0.0
    %1331 = vmatpush1.msra.mxu0 0.0
    %1332 = vmatprep.subr.mxu0 0.0
    %1333 = vmatpush1.msra.mxu0 0.0
    %1334 = vmatprep.subr.mxu0 0.0
    %1335 = vmatpush1.msra.mxu0 0.0
    %1336 = vmatprep.subr.mxu0 0.0
    %1337 = vmatpush1.msra.mxu0 0.0
    %1338 = vmatprep.subr.mxu0 0.0
    %1339 = vmatpush1.msra.mxu0 0.0
    %1340 = vmatprep.subr.mxu0 0.0
    %1341 = vmatpush1.msra.mxu0 0.0
    %1342 = vmatprep.subr.mxu0 0.0
    %1343 = vmatpush1.msra.mxu0 0.0
    %1344 = vmatprep.subr.mxu0 0.0
    %1345 = vmatpush1.msra.mxu0 0.0
    %1346 = vmatprep.subr.mxu0 0.0
    %1347 = vmatpush1.msra.mxu0 0.0
    %1348 = vmatprep.subr.mxu0 0.0
    %1349 = vmatpush1.msra.mxu0 0.0
    %1350 = vmatprep.subr.mxu0 0.0
    %1351 = vmatpush1.msra.mxu0 0.0
    %1352 = vmatprep.subr.mxu0 0.0
    %1353 = vmatpush1.msra.mxu0 0.0
    %1354 = vmatprep.subr.mxu0 0.0
    %1355 = vmatpush1.msra.mxu0 0.0
    %1356 = vmatprep.subr.mxu0 0.0
    %1357 = vmatpush1.msra.mxu0 0.0
    %1358 = vmatprep.subr.mxu0 0.0
    %1359 = vmatpush1.msra.mxu0 %v591
    %1360 = vmatprep.subr.mxu0 0.0
    %1361 = vmatpush2.msra.mxu0 0.0
    %1362 = vmatprep.subr.mxu0 0.0
    %1363 = vmatpush2.msra.mxu0 0.0
    %1364 = vmatprep.subr.mxu0 0.0
    %1365 = vmatpush2.msra.mxu0 0.0
    %1366 = vmatprep.subr.mxu0 0.0
    %1367 = vmatpush2.msra.mxu0 0.0
    %1368 = vmatprep.subr.mxu0 0.0
    %1369 = vmatpush2.msra.mxu0 0.0
    %1370 = vmatprep.subr.mxu0 0.0
    %1371 = vmatpush2.msra.mxu0 0.0
    %1372 = vmatprep.subr.mxu0 0.0
    %1373 = vmatpush2.msra.mxu0 0.0
    %1374 = vmatprep.subr.mxu0 0.0
    %1375 = vmatpush2.msra.mxu0 0.0
    %1376 = vmatprep.subr.mxu0 0.0
    %1377 = vmatpush2.msra.mxu0 0.0
    %1378 = vmatprep.subr.mxu0 0.0
    %1379 = vmatpush2.msra.mxu0 0.0
    %1380 = vmatprep.subr.mxu0 0.0
    %1381 = vmatpush2.msra.mxu0 0.0
    %1382 = vmatprep.subr.mxu0 0.0
    %1383 = vmatpush2.msra.mxu0 0.0
    %1384 = vmatprep.subr.mxu0 0.0
    %1385 = vmatpush2.msra.mxu0 0.0
    %1386 = vmatprep.subr.mxu0 0.0
    %1387 = vmatpush2.msra.mxu0 0.0
    %1388 = vmatprep.subr.mxu0 0.0
    %1389 = vmatpush2.msra.mxu0 0.0
    %1390 = vmatprep.subr.mxu0 0.0
    %1391 = vmatpush2.msra.mxu0 0.0
    %1392 = vmatprep.mubr.f32.mxu0 0.0
    %1393 = vmatmul.mubr.f32.gmra.mxu0 %v1326
    %v1394 = vpop.f32.mrf.mxu0
    %v1395 = vadd.f32 0.0, %v1394
    %v1396 = vpop.f32.mrf.mxu0
    %1397 = vdwg.mxu0
    %v1399 = vsel %vm594, %v841, 0
    %1401 = vmatprep.subr.mxu0 0.0
    %1402 = vmatpush1.msra.mxu0 0.0
    %1403 = vmatprep.subr.mxu0 0.0
    %1404 = vmatpush1.msra.mxu0 0.0
    %1405 = vmatprep.subr.mxu0 0.0
    %1406 = vmatpush1.msra.mxu0 0.0
    %1407 = vmatprep.subr.mxu0 0.0
    %1408 = vmatpush1.msra.mxu0 0.0
    %1409 = vmatprep.subr.mxu0 0.0
    %1410 = vmatpush1.msra.mxu0 0.0
    %1411 = vmatprep.subr.mxu0 0.0
    %1412 = vmatpush1.msra.mxu0 0.0
    %1413 = vmatprep.subr.mxu0 0.0
    %1414 = vmatpush1.msra.mxu0 0.0
    %1415 = vmatprep.subr.mxu0 0.0
    %1416 = vmatpush1.msra.mxu0 0.0
    %1417 = vmatprep.subr.mxu0 0.0
    %1418 = vmatpush1.msra.mxu0 0.0
    %1419 = vmatprep.subr.mxu0 0.0
    %1420 = vmatpush1.msra.mxu0 0.0
    %1421 = vmatprep.subr.mxu0 0.0
    %1422 = vmatpush1.msra.mxu0 0.0
    %1423 = vmatprep.subr.mxu0 0.0
    %1424 = vmatpush1.msra.mxu0 0.0
    %1425 = vmatprep.subr.mxu0 0.0
    %1426 = vmatpush1.msra.mxu0 0.0
    %1427 = vmatprep.subr.mxu0 0.0
    %1428 = vmatpush1.msra.mxu0 0.0
    %1429 = vmatprep.subr.mxu0 0.0
    %1430 = vmatpush1.msra.mxu0 0.0
    %1431 = vmatprep.subr.mxu0 0.0
    %1432 = vmatpush1.msra.mxu0 %v590
    %1433 = vmatprep.subr.mxu0 0.0
    %1434 = vmatpush2.msra.mxu0 0.0
    %1435 = vmatprep.subr.mxu0 0.0
    %1436 = vmatpush2.msra.mxu0 0.0
    %1437 = vmatprep.subr.mxu0 0.0
    %1438 = vmatpush2.msra.mxu0 0.0
    %1439 = vmatprep.subr.mxu0 0.0
    %1440 = vmatpush2.msra.mxu0 0.0
    %1441 = vmatprep.subr.mxu0 0.0
    %1442 = vmatpush2.msra.mxu0 0.0
    %1443 = vmatprep.subr.mxu0 0.0
    %1444 = vmatpush2.msra.mxu0 0.0
    %1445 = vmatprep.subr.mxu0 0.0
    %1446 = vmatpush2.msra.mxu0 0.0
    %1447 = vmatprep.subr.mxu0 0.0
    %1448 = vmatpush2.msra.mxu0 0.0
    %1449 = vmatprep.subr.mxu0 0.0
    %1450 = vmatpush2.msra.mxu0 0.0
    %1451 = vmatprep.subr.mxu0 0.0
    %1452 = vmatpush2.msra.mxu0 0.0
    %1453 = vmatprep.subr.mxu0 0.0
    %1454 = vmatpush2.msra.mxu0 0.0
    %1455 = vmatprep.subr.mxu0 0.0
    %1456 = vmatpush2.msra.mxu0 0.0
    %1457 = vmatprep.subr.mxu0 0.0
    %1458 = vmatpush2.msra.mxu0 0.0
    %1459 = vmatprep.subr.mxu0 0.0
    %1460 = vmatpush2.msra.mxu0 0.0
    %1461 = vmatprep.subr.mxu0 0.0
    %1462 = vmatpush2.msra.mxu0 0.0
    %1463 = vmatprep.subr.mxu0 0.0
    %1464 = vmatpush2.msra.mxu0 0.0
    %1465 = vmatprep.mubr.f32.mxu0 0.0
    %1466 = vmatmul.mubr.f32.gmra.mxu0 %v1399
    %v1467 = vpop.f32.mrf.mxu0
    %v1468 = vadd.f32 %v1322, %v1467
    %v1469 = vpop.f32.mrf.mxu0
    %1470 = vdwg.mxu0
    %v1472 = vsel %vm594, %v914, 0
    %1474 = vmatprep.subr.mxu0 0.0
    %1475 = vmatpush1.msra.mxu0 0.0
    %1476 = vmatprep.subr.mxu0 0.0
    %1477 = vmatpush1.msra.mxu0 0.0
    %1478 = vmatprep.subr.mxu0 0.0
    %1479 = vmatpush1.msra.mxu0 0.0
    %1480 = vmatprep.subr.mxu0 0.0
    %1481 = vmatpush1.msra.mxu0 0.0
    %1482 = vmatprep.subr.mxu0 0.0
    %1483 = vmatpush1.msra.mxu0 0.0
    %1484 = vmatprep.subr.mxu0 0.0
    %1485 = vmatpush1.msra.mxu0 0.0
    %1486 = vmatprep.subr.mxu0 0.0
    %1487 = vmatpush1.msra.mxu0 0.0
    %1488 = vmatprep.subr.mxu0 0.0
    %1489 = vmatpush1.msra.mxu0 0.0
    %1490 = vmatprep.subr.mxu0 0.0
    %1491 = vmatpush1.msra.mxu0 0.0
    %1492 = vmatprep.subr.mxu0 0.0
    %1493 = vmatpush1.msra.mxu0 0.0
    %1494 = vmatprep.subr.mxu0 0.0
    %1495 = vmatpush1.msra.mxu0 0.0
    %1496 = vmatprep.subr.mxu0 0.0
    %1497 = vmatpush1.msra.mxu0 0.0
    %1498 = vmatprep.subr.mxu0 0.0
    %1499 = vmatpush1.msra.mxu0 0.0
    %1500 = vmatprep.subr.mxu0 0.0
    %1501 = vmatpush1.msra.mxu0 0.0
    %1502 = vmatprep.subr.mxu0 0.0
    %1503 = vmatpush1.msra.mxu0 0.0
    %1504 = vmatprep.subr.mxu0 0.0
    %1505 = vmatpush1.msra.mxu0 %v590
    %1506 = vmatprep.subr.mxu0 0.0
    %1507 = vmatpush2.msra.mxu0 0.0
    %1508 = vmatprep.subr.mxu0 0.0
    %1509 = vmatpush2.msra.mxu0 0.0
    %1510 = vmatprep.subr.mxu0 0.0
    %1511 = vmatpush2.msra.mxu0 0.0
    %1512 = vmatprep.subr.mxu0 0.0
    %1513 = vmatpush2.msra.mxu0 0.0
    %1514 = vmatprep.subr.mxu0 0.0
    %1515 = vmatpush2.msra.mxu0 0.0
    %1516 = vmatprep.subr.mxu0 0.0
    %1517 = vmatpush2.msra.mxu0 0.0
    %1518 = vmatprep.subr.mxu0 0.0
    %1519 = vmatpush2.msra.mxu0 0.0
    %1520 = vmatprep.subr.mxu0 0.0
    %1521 = vmatpush2.msra.mxu0 0.0
    %1522 = vmatprep.subr.mxu0 0.0
    %1523 = vmatpush2.msra.mxu0 0.0
    %1524 = vmatprep.subr.mxu0 0.0
    %1525 = vmatpush2.msra.mxu0 0.0
    %1526 = vmatprep.subr.mxu0 0.0
    %1527 = vmatpush2.msra.mxu0 0.0
    %1528 = vmatprep.subr.mxu0 0.0
    %1529 = vmatpush2.msra.mxu0 0.0
    %1530 = vmatprep.subr.mxu0 0.0
    %1531 = vmatpush2.msra.mxu0 0.0
    %1532 = vmatprep.subr.mxu0 0.0
    %1533 = vmatpush2.msra.mxu0 0.0
    %1534 = vmatprep.subr.mxu0 0.0
    %1535 = vmatpush2.msra.mxu0 0.0
    %1536 = vmatprep.subr.mxu0 0.0
    %1537 = vmatpush2.msra.mxu0 0.0
    %1538 = vmatprep.mubr.f32.mxu0 0.0
    %1539 = vmatmul.mubr.f32.gmra.mxu0 %v1472
    %v1540 = vpop.f32.mrf.mxu0
    %v1541 = vadd.f32 %v1395, %v1540
    %v1542 = vpop.f32.mrf.mxu0
    %1543 = vdwg.mxu0
    %1544 = vrot.lane.b32.xlu0 %v222, 112
    %v1545 = vpop.permute.xlu0 %1544
    %1546 = vrot.lane.b32.xlu0 %v368, 112
    %v1547 = vpop.permute.xlu0 %1546
    %v1548 = vsel %vm594, %v1545, 0
    %v1550 = vsel %vm594, %v1547, 0
    %1552 = vmatprep.subr.mxu0 0.0
    %1553 = vmatpush1.xpose.msra.mxu0 0.0
    %1554 = vmatprep.subr.mxu0 0.0
    %1555 = vmatpush1.xpose.msra.mxu0 0.0
    %1556 = vmatprep.subr.mxu0 0.0
    %1557 = vmatpush1.xpose.msra.mxu0 0.0
    %1558 = vmatprep.subr.mxu0 0.0
    %1559 = vmatpush1.xpose.msra.mxu0 0.0
    %1560 = vmatprep.subr.mxu0 0.0
    %1561 = vmatpush1.xpose.msra.mxu0 0.0
    %1562 = vmatprep.subr.mxu0 0.0
    %1563 = vmatpush1.xpose.msra.mxu0 0.0
    %1564 = vmatprep.subr.mxu0 0.0
    %1565 = vmatpush1.xpose.msra.mxu0 0.0
    %1566 = vmatprep.subr.mxu0 0.0
    %1567 = vmatpush1.xpose.msra.mxu0 0.0
    %1568 = vmatprep.subr.mxu0 0.0
    %1569 = vmatpush1.xpose.msra.mxu0 0.0
    %1570 = vmatprep.subr.mxu0 0.0
    %1571 = vmatpush1.xpose.msra.mxu0 0.0
    %1572 = vmatprep.subr.mxu0 0.0
    %1573 = vmatpush1.xpose.msra.mxu0 0.0
    %1574 = vmatprep.subr.mxu0 0.0
    %1575 = vmatpush1.xpose.msra.mxu0 0.0
    %1576 = vmatprep.subr.mxu0 0.0
    %1577 = vmatpush1.xpose.msra.mxu0 0.0
    %1578 = vmatprep.subr.mxu0 0.0
    %1579 = vmatpush1.xpose.msra.mxu0 0.0
    %1580 = vmatprep.subr.mxu0 0.0
    %1581 = vmatpush1.xpose.msra.mxu0 0.0
    %1582 = vmatprep.subr.mxu0 0.0
    %1583 = vmatpush1.xpose.msra.mxu0 %v1550
    %1584 = vmatprep.subr.mxu0 0.0
    %1585 = vmatpush2.xpose.msra.mxu0 0.0
    %1586 = vmatprep.subr.mxu0 0.0
    %1587 = vmatpush2.xpose.msra.mxu0 0.0
    %1588 = vmatprep.subr.mxu0 0.0
    %1589 = vmatpush2.xpose.msra.mxu0 0.0
    %1590 = vmatprep.subr.mxu0 0.0
    %1591 = vmatpush2.xpose.msra.mxu0 0.0
    %1592 = vmatprep.subr.mxu0 0.0
    %1593 = vmatpush2.xpose.msra.mxu0 0.0
    %1594 = vmatprep.subr.mxu0 0.0
    %1595 = vmatpush2.xpose.msra.mxu0 0.0
    %1596 = vmatprep.subr.mxu0 0.0
    %1597 = vmatpush2.xpose.msra.mxu0 0.0
    %1598 = vmatprep.subr.mxu0 0.0
    %1599 = vmatpush2.xpose.msra.mxu0 0.0
    %1600 = vmatprep.subr.mxu0 0.0
    %1601 = vmatpush2.xpose.msra.mxu0 0.0
    %1602 = vmatprep.subr.mxu0 0.0
    %1603 = vmatpush2.xpose.msra.mxu0 0.0
    %1604 = vmatprep.subr.mxu0 0.0
    %1605 = vmatpush2.xpose.msra.mxu0 0.0
    %1606 = vmatprep.subr.mxu0 0.0
    %1607 = vmatpush2.xpose.msra.mxu0 0.0
    %1608 = vmatprep.subr.mxu0 0.0
    %1609 = vmatpush2.xpose.msra.mxu0 0.0
    %1610 = vmatprep.subr.mxu0 0.0
    %1611 = vmatpush2.xpose.msra.mxu0 0.0
    %1612 = vmatprep.subr.mxu0 0.0
    %1613 = vmatpush2.xpose.msra.mxu0 0.0
    %1614 = vmatprep.subr.mxu0 0.0
    %1615 = vmatpush2.xpose.msra.mxu0 0.0
    %1616 = vmatprep.mubr.f32.mxu0 0.0
    %1617 = vmatmul.mubr.f32.gmra.mxu0 %v1548
    %v1618 = vpop.f32.mrf.mxu0
    %v1619 = vadd.f32 0.0, %v1618
    %v1620 = vpop.f32.mrf.mxu0
    %1621 = vdwg.mxu0
    %1622 = vrot.lane.b32.xlu0 %v295, 112
    %v1623 = vpop.permute.xlu0 %1622
    %1624 = vrot.lane.b32.xlu0 %v441, 112
    %v1625 = vpop.permute.xlu0 %1624
    %v1626 = vsel %vm594, %v1623, 0
    %v1628 = vsel %vm594, %v1625, 0
    %1630 = vmatprep.subr.mxu0 0.0
    %1631 = vmatpush1.xpose.msra.mxu0 0.0
    %1632 = vmatprep.subr.mxu0 0.0
    %1633 = vmatpush1.xpose.msra.mxu0 0.0
    %1634 = vmatprep.subr.mxu0 0.0
    %1635 = vmatpush1.xpose.msra.mxu0 0.0
    %1636 = vmatprep.subr.mxu0 0.0
    %1637 = vmatpush1.xpose.msra.mxu0 0.0
    %1638 = vmatprep.subr.mxu0 0.0
    %1639 = vmatpush1.xpose.msra.mxu0 0.0
    %1640 = vmatprep.subr.mxu0 0.0
    %1641 = vmatpush1.xpose.msra.mxu0 0.0
    %1642 = vmatprep.subr.mxu0 0.0
    %1643 = vmatpush1.xpose.msra.mxu0 0.0
    %1644 = vmatprep.subr.mxu0 0.0
    %1645 = vmatpush1.xpose.msra.mxu0 0.0
    %1646 = vmatprep.subr.mxu0 0.0
    %1647 = vmatpush1.xpose.msra.mxu0 0.0
    %1648 = vmatprep.subr.mxu0 0.0
    %1649 = vmatpush1.xpose.msra.mxu0 0.0
    %1650 = vmatprep.subr.mxu0 0.0
    %1651 = vmatpush1.xpose.msra.mxu0 0.0
    %1652 = vmatprep.subr.mxu0 0.0
    %1653 = vmatpush1.xpose.msra.mxu0 0.0
    %1654 = vmatprep.subr.mxu0 0.0
    %1655 = vmatpush1.xpose.msra.mxu0 0.0
    %1656 = vmatprep.subr.mxu0 0.0
    %1657 = vmatpush1.xpose.msra.mxu0 0.0
    %1658 = vmatprep.subr.mxu0 0.0
    %1659 = vmatpush1.xpose.msra.mxu0 0.0
    %1660 = vmatprep.subr.mxu0 0.0
    %1661 = vmatpush1.xpose.msra.mxu0 %v1628
    %1662 = vmatprep.subr.mxu0 0.0
    %1663 = vmatpush2.xpose.msra.mxu0 0.0
    %1664 = vmatprep.subr.mxu0 0.0
    %1665 = vmatpush2.xpose.msra.mxu0 0.0
    %1666 = vmatprep.subr.mxu0 0.0
    %1667 = vmatpush2.xpose.msra.mxu0 0.0
    %1668 = vmatprep.subr.mxu0 0.0
    %1669 = vmatpush2.xpose.msra.mxu0 0.0
    %1670 = vmatprep.subr.mxu0 0.0
    %1671 = vmatpush2.xpose.msra.mxu0 0.0
    %1672 = vmatprep.subr.mxu0 0.0
    %1673 = vmatpush2.xpose.msra.mxu0 0.0
    %1674 = vmatprep.subr.mxu0 0.0
    %1675 = vmatpush2.xpose.msra.mxu0 0.0
    %1676 = vmatprep.subr.mxu0 0.0
    %1677 = vmatpush2.xpose.msra.mxu0 0.0
    %1678 = vmatprep.subr.mxu0 0.0
    %1679 = vmatpush2.xpose.msra.mxu0 0.0
    %1680 = vmatprep.subr.mxu0 0.0
    %1681 = vmatpush2.xpose.msra.mxu0 0.0
    %1682 = vmatprep.subr.mxu0 0.0
    %1683 = vmatpush2.xpose.msra.mxu0 0.0
    %1684 = vmatprep.subr.mxu0 0.0
    %1685 = vmatpush2.xpose.msra.mxu0 0.0
    %1686 = vmatprep.subr.mxu0 0.0
    %1687 = vmatpush2.xpose.msra.mxu0 0.0
    %1688 = vmatprep.subr.mxu0 0.0
    %1689 = vmatpush2.xpose.msra.mxu0 0.0
    %1690 = vmatprep.subr.mxu0 0.0
    %1691 = vmatpush2.xpose.msra.mxu0 0.0
    %1692 = vmatprep.subr.mxu0 0.0
    %1693 = vmatpush2.xpose.msra.mxu0 0.0
    %1694 = vmatprep.mubr.f32.mxu0 0.0
    %1695 = vmatmul.mubr.f32.gmra.mxu0 %v1626
    %v1696 = vpop.f32.mrf.mxu0
    %v1697 = vadd.f32 0.0, %v1696
    %v1698 = vpop.f32.mrf.mxu0
    %1699 = vdwg.mxu0
    %v1700 = vsel %vm594, %v1619, -inf
    %1701 = vmax.xlane.f32.xlu0 %v1700
    %v1702 = vpop.xlane.xlu0 %1701
    %v1703 = vsel %vm594, %v1697, -inf
    %1704 = vmax.xlane.f32.xlu0 %v1703
    %v1705 = vpop.xlane.xlu0 %1704
    %v1706 = vsub.f32 %v1619, %v1702
    %v1707 = vsub.f32 %v1697, %v1705
    %v1708 = vmul.f32 %v1706, 1.442695
    %v1709 = vpow.pop %v1708
    %v1710 = vmul.f32 %v1707, 1.442695
    %v1711 = vpow.pop %v1710
    %v1712 = vsel %vm594, %v1709, 0.0
    %1713 = vadd.xlane.f32.xlu0 %v1712
    %v1714 = vpop.xlane.xlu0 %1713
    %v1715 = vsel %vm594, %v1711, 0.0
    %1716 = vadd.xlane.f32.xlu0 %v1715
    %v1717 = vpop.xlane.xlu0 %1716
    %v1718 = vrcp.pop %v1714
    %v1719 = vrcp.pop %v1717
    %v1720 = vmul.f32 %v1709, %v1718
    %v1721 = vmul.f32 %v1711, %v1719
    %s1722 = scalar_lea.vmem [#allocation11], 32
    %1723 = vst.msk [vmem:[%s1722] sm:$0xff] %vm594, %v1720
    %1724 = vst.msk [vmem:[%s1722 + $0x8] sm:$0xff] %vm594, %v1721
    %1725 = vrot.lane.b32.xlu0 %v514, 112
    %v1726 = vpop.permute.xlu0 %1725
    %v1729 = vsel %vm594, %v1720, 0
    %1731 = vmatprep.subr.mxu0 0.0
    %1732 = vmatpush1.msra.mxu0 0.0
    %1733 = vmatprep.subr.mxu0 0.0
    %1734 = vmatpush1.msra.mxu0 0.0
    %1735 = vmatprep.subr.mxu0 0.0
    %1736 = vmatpush1.msra.mxu0 0.0
    %1737 = vmatprep.subr.mxu0 0.0
    %1738 = vmatpush1.msra.mxu0 0.0
    %1739 = vmatprep.subr.mxu0 0.0
    %1740 = vmatpush1.msra.mxu0 0.0
    %1741 = vmatprep.subr.mxu0 0.0
    %1742 = vmatpush1.msra.mxu0 0.0
    %1743 = vmatprep.subr.mxu0 0.0
    %1744 = vmatpush1.msra.mxu0 0.0
    %1745 = vmatprep.subr.mxu0 0.0
    %1746 = vmatpush1.msra.mxu0 0.0
    %1747 = vmatprep.subr.mxu0 0.0
    %1748 = vmatpush1.msra.mxu0 0.0
    %1749 = vmatprep.subr.mxu0 0.0
    %1750 = vmatpush1.msra.mxu0 0.0
    %1751 = vmatprep.subr.mxu0 0.0
    %1752 = vmatpush1.msra.mxu0 0.0
    %1753 = vmatprep.subr.mxu0 0.0
    %1754 = vmatpush1.msra.mxu0 0.0
    %1755 = vmatprep.subr.mxu0 0.0
    %1756 = vmatpush1.msra.mxu0 0.0
    %1757 = vmatprep.subr.mxu0 0.0
    %1758 = vmatpush1.msra.mxu0 0.0
    %1759 = vmatprep.subr.mxu0 0.0
    %1760 = vmatpush1.msra.mxu0 0.0
    %1761 = vmatprep.subr.mxu0 0.0
    %1762 = vmatpush1.msra.mxu0 %v1726
    %1763 = vmatprep.subr.mxu0 0.0
    %1764 = vmatpush2.msra.mxu0 0.0
    %1765 = vmatprep.subr.mxu0 0.0
    %1766 = vmatpush2.msra.mxu0 0.0
    %1767 = vmatprep.subr.mxu0 0.0
    %1768 = vmatpush2.msra.mxu0 0.0
    %1769 = vmatprep.subr.mxu0 0.0
    %1770 = vmatpush2.msra.mxu0 0.0
    %1771 = vmatprep.subr.mxu0 0.0
    %1772 = vmatpush2.msra.mxu0 0.0
    %1773 = vmatprep.subr.mxu0 0.0
    %1774 = vmatpush2.msra.mxu0 0.0
    %1775 = vmatprep.subr.mxu0 0.0
    %1776 = vmatpush2.msra.mxu0 0.0
    %1777 = vmatprep.subr.mxu0 0.0
    %1778 = vmatpush2.msra.mxu0 0.0
    %1779 = vmatprep.subr.mxu0 0.0
    %1780 = vmatpush2.msra.mxu0 0.0
    %1781 = vmatprep.subr.mxu0 0.0
    %1782 = vmatpush2.msra.mxu0 0.0
    %1783 = vmatprep.subr.mxu0 0.0
    %1784 = vmatpush2.msra.mxu0 0.0
    %1785 = vmatprep.subr.mxu0 0.0
    %1786 = vmatpush2.msra.mxu0 0.0
    %1787 = vmatprep.subr.mxu0 0.0
    %1788 = vmatpush2.msra.mxu0 0.0
    %1789 = vmatprep.subr.mxu0 0.0
    %1790 = vmatpush2.msra.mxu0 0.0
    %1791 = vmatprep.subr.mxu0 0.0
    %1792 = vmatpush2.msra.mxu0 0.0
    %1793 = vmatprep.subr.mxu0 0.0
    %1794 = vmatpush2.msra.mxu0 0.0
    %1795 = vmatprep.mubr.f32.mxu0 0.0
    %1796 = vmatmul.mubr.f32.gmra.mxu0 %v1729
    %v1797 = vpop.f32.mrf.mxu0
    %v1798 = vadd.f32 0.0, %v1797
    %v1799 = vpop.f32.mrf.mxu0
    %1800 = vdwg.mxu0
    %1801 = vrot.lane.b32.xlu0 %v587, 112
    %v1802 = vpop.permute.xlu0 %1801
    %v1805 = vsel %vm594, %v1721, 0
    %1807 = vmatprep.subr.mxu0 0.0
    %1808 = vmatpush1.msra.mxu0 0.0
    %1809 = vmatprep.subr.mxu0 0.0
    %1810 = vmatpush1.msra.mxu0 0.0
    %1811 = vmatprep.subr.mxu0 0.0
    %1812 = vmatpush1.msra.mxu0 0.0
    %1813 = vmatprep.subr.mxu0 0.0
    %1814 = vmatpush1.msra.mxu0 0.0
    %1815 = vmatprep.subr.mxu0 0.0
    %1816 = vmatpush1.msra.mxu0 0.0
    %1817 = vmatprep.subr.mxu0 0.0
    %1818 = vmatpush1.msra.mxu0 0.0
    %1819 = vmatprep.subr.mxu0 0.0
    %1820 = vmatpush1.msra.mxu0 0.0
    %1821 = vmatprep.subr.mxu0 0.0
    %1822 = vmatpush1.msra.mxu0 0.0
    %1823 = vmatprep.subr.mxu0 0.0
    %1824 = vmatpush1.msra.mxu0 0.0
    %1825 = vmatprep.subr.mxu0 0.0
    %1826 = vmatpush1.msra.mxu0 0.0
    %1827 = vmatprep.subr.mxu0 0.0
    %1828 = vmatpush1.msra.mxu0 0.0
    %1829 = vmatprep.subr.mxu0 0.0
    %1830 = vmatpush1.msra.mxu0 0.0
    %1831 = vmatprep.subr.mxu0 0.0
    %1832 = vmatpush1.msra.mxu0 0.0
    %1833 = vmatprep.subr.mxu0 0.0
    %1834 = vmatpush1.msra.mxu0 0.0
    %1835 = vmatprep.subr.mxu0 0.0
    %1836 = vmatpush1.msra.mxu0 0.0
    %1837 = vmatprep.subr.mxu0 0.0
    %1838 = vmatpush1.msra.mxu0 %v1802
    %1839 = vmatprep.subr.mxu0 0.0
    %1840 = vmatpush2.msra.mxu0 0.0
    %1841 = vmatprep.subr.mxu0 0.0
    %1842 = vmatpush2.msra.mxu0 0.0
    %1843 = vmatprep.subr.mxu0 0.0
    %1844 = vmatpush2.msra.mxu0 0.0
    %1845 = vmatprep.subr.mxu0 0.0
    %1846 = vmatpush2.msra.mxu0 0.0
    %1847 = vmatprep.subr.mxu0 0.0
    %1848 = vmatpush2.msra.mxu0 0.0
    %1849 = vmatprep.subr.mxu0 0.0
    %1850 = vmatpush2.msra.mxu0 0.0
    %1851 = vmatprep.subr.mxu0 0.0
    %1852 = vmatpush2.msra.mxu0 0.0
    %1853 = vmatprep.subr.mxu0 0.0
    %1854 = vmatpush2.msra.mxu0 0.0
    %1855 = vmatprep.subr.mxu0 0.0
    %1856 = vmatpush2.msra.mxu0 0.0
    %1857 = vmatprep.subr.mxu0 0.0
    %1858 = vmatpush2.msra.mxu0 0.0
    %1859 = vmatprep.subr.mxu0 0.0
    %1860 = vmatpush2.msra.mxu0 0.0
    %1861 = vmatprep.subr.mxu0 0.0
    %1862 = vmatpush2.msra.mxu0 0.0
    %1863 = vmatprep.subr.mxu0 0.0
    %1864 = vmatpush2.msra.mxu0 0.0
    %1865 = vmatprep.subr.mxu0 0.0
    %1866 = vmatpush2.msra.mxu0 0.0
    %1867 = vmatprep.subr.mxu0 0.0
    %1868 = vmatpush2.msra.mxu0 0.0
    %1869 = vmatprep.subr.mxu0 0.0
    %1870 = vmatpush2.msra.mxu0 0.0
    %1871 = vmatprep.mubr.f32.mxu0 0.0
    %1872 = vmatmul.mubr.f32.gmra.mxu0 %v1805
    %v1873 = vpop.f32.mrf.mxu0
    %v1874 = vadd.f32 0.0, %v1873
    %v1875 = vpop.f32.mrf.mxu0
    %1876 = vdwg.mxu0
    %v1878 = vsel %vm594, %v1798, 0
    %1880 = vmatprep.subr.mxu0 0.0
    %1881 = vmatpush1.msra.mxu0 0.0
    %1882 = vmatprep.subr.mxu0 0.0
    %1883 = vmatpush1.msra.mxu0 0.0
    %1884 = vmatprep.subr.mxu0 0.0
    %1885 = vmatpush1.msra.mxu0 0.0
    %1886 = vmatprep.subr.mxu0 0.0
    %1887 = vmatpush1.msra.mxu0 0.0
    %1888 = vmatprep.subr.mxu0 0.0
    %1889 = vmatpush1.msra.mxu0 0.0
    %1890 = vmatprep.subr.mxu0 0.0
    %1891 = vmatpush1.msra.mxu0 0.0
    %1892 = vmatprep.subr.mxu0 0.0
    %1893 = vmatpush1.msra.mxu0 0.0
    %1894 = vmatprep.subr.mxu0 0.0
    %1895 = vmatpush1.msra.mxu0 0.0
    %1896 = vmatprep.subr.mxu0 0.0
    %1897 = vmatpush1.msra.mxu0 0.0
    %1898 = vmatprep.subr.mxu0 0.0
    %1899 = vmatpush1.msra.mxu0 0.0
    %1900 = vmatprep.subr.mxu0 0.0
    %1901 = vmatpush1.msra.mxu0 0.0
    %1902 = vmatprep.subr.mxu0 0.0
    %1903 = vmatpush1.msra.mxu0 0.0
    %1904 = vmatprep.subr.mxu0 0.0
    %1905 = vmatpush1.msra.mxu0 0.0
    %1906 = vmatprep.subr.mxu0 0.0
    %1907 = vmatpush1.msra.mxu0 0.0
    %1908 = vmatprep.subr.mxu0 0.0
    %1909 = vmatpush1.msra.mxu0 0.0
    %1910 = vmatprep.subr.mxu0 0.0
    %1911 = vmatpush1.msra.mxu0 %v592
    %1912 = vmatprep.subr.mxu0 0.0
    %1913 = vmatpush2.msra.mxu0 0.0
    %1914 = vmatprep.subr.mxu0 0.0
    %1915 = vmatpush2.msra.mxu0 0.0
    %1916 = vmatprep.subr.mxu0 0.0
    %1917 = vmatpush2.msra.mxu0 0.0
    %1918 = vmatprep.subr.mxu0 0.0
    %1919 = vmatpush2.msra.mxu0 0.0
    %1920 = vmatprep.subr.mxu0 0.0
    %1921 = vmatpush2.msra.mxu0 0.0
    %1922 = vmatprep.subr.mxu0 0.0
    %1923 = vmatpush2.msra.mxu0 0.0
    %1924 = vmatprep.subr.mxu0 0.0
    %1925 = vmatpush2.msra.mxu0 0.0
    %1926 = vmatprep.subr.mxu0 0.0
    %1927 = vmatpush2.msra.mxu0 0.0
    %1928 = vmatprep.subr.mxu0 0.0
    %1929 = vmatpush2.msra.mxu0 0.0
    %1930 = vmatprep.subr.mxu0 0.0
    %1931 = vmatpush2.msra.mxu0 0.0
    %1932 = vmatprep.subr.mxu0 0.0
    %1933 = vmatpush2.msra.mxu0 0.0
    %1934 = vmatprep.subr.mxu0 0.0
    %1935 = vmatpush2.msra.mxu0 0.0
    %1936 = vmatprep.subr.mxu0 0.0
    %1937 = vmatpush2.msra.mxu0 0.0
    %1938 = vmatprep.subr.mxu0 0.0
    %1939 = vmatpush2.msra.mxu0 0.0
    %1940 = vmatprep.subr.mxu0 0.0
    %1941 = vmatpush2.msra.mxu0 0.0
    %1942 = vmatprep.subr.mxu0 0.0
    %1943 = vmatpush2.msra.mxu0 0.0
    %1944 = vmatprep.mubr.f32.mxu0 0.0
    %1945 = vmatmul.mubr.f32.gmra.mxu0 %v1878
    %v1946 = vpop.f32.mrf.mxu0
    %v1947 = vadd.f32 0.0, %v1946
    %v1948 = vpop.f32.mrf.mxu0
    %1949 = vdwg.mxu0
    %v1951 = vsel %vm594, %v1874, 0
    %1953 = vmatprep.subr.mxu0 0.0
    %1954 = vmatpush1.msra.mxu0 0.0
    %1955 = vmatprep.subr.mxu0 0.0
    %1956 = vmatpush1.msra.mxu0 0.0
    %1957 = vmatprep.subr.mxu0 0.0
    %1958 = vmatpush1.msra.mxu0 0.0
    %1959 = vmatprep.subr.mxu0 0.0
    %1960 = vmatpush1.msra.mxu0 0.0
    %1961 = vmatprep.subr.mxu0 0.0
    %1962 = vmatpush1.msra.mxu0 0.0
    %1963 = vmatprep.subr.mxu0 0.0
    %1964 = vmatpush1.msra.mxu0 0.0
    %1965 = vmatprep.subr.mxu0 0.0
    %1966 = vmatpush1.msra.mxu0 0.0
    %1967 = vmatprep.subr.mxu0 0.0
    %1968 = vmatpush1.msra.mxu0 0.0
    %1969 = vmatprep.subr.mxu0 0.0
    %1970 = vmatpush1.msra.mxu0 0.0
    %1971 = vmatprep.subr.mxu0 0.0
    %1972 = vmatpush1.msra.mxu0 0.0
    %1973 = vmatprep.subr.mxu0 0.0
    %1974 = vmatpush1.msra.mxu0 0.0
    %1975 = vmatprep.subr.mxu0 0.0
    %1976 = vmatpush1.msra.mxu0 0.0
    %1977 = vmatprep.subr.mxu0 0.0
    %1978 = vmatpush1.msra.mxu0 0.0
    %1979 = vmatprep.subr.mxu0 0.0
    %1980 = vmatpush1.msra.mxu0 0.0
    %1981 = vmatprep.subr.mxu0 0.0
    %1982 = vmatpush1.msra.mxu0 0.0
    %1983 = vmatprep.subr.mxu0 0.0
    %1984 = vmatpush1.msra.mxu0 %v592
    %1985 = vmatprep.subr.mxu0 0.0
    %1986 = vmatpush2.msra.mxu0 0.0
    %1987 = vmatprep.subr.mxu0 0.0
    %1988 = vmatpush2.msra.mxu0 0.0
    %1989 = vmatprep.subr.mxu0 0.0
    %1990 = vmatpush2.msra.mxu0 0.0
    %1991 = vmatprep.subr.mxu0 0.0
    %1992 = vmatpush2.msra.mxu0 0.0
    %1993 = vmatprep.subr.mxu0 0.0
    %1994 = vmatpush2.msra.mxu0 0.0
    %1995 = vmatprep.subr.mxu0 0.0
    %1996 = vmatpush2.msra.mxu0 0.0
    %1997 = vmatprep.subr.mxu0 0.0
    %1998 = vmatpush2.msra.mxu0 0.0
    %1999 = vmatprep.subr.mxu0 0.0
    %2000 = vmatpush2.msra.mxu0 0.0
    %2001 = vmatprep.subr.mxu0 0.0
    %2002 = vmatpush2.msra.mxu0 0.0
    %2003 = vmatprep.subr.mxu0 0.0
    %2004 = vmatpush2.msra.mxu0 0.0
    %2005 = vmatprep.subr.mxu0 0.0
    %2006 = vmatpush2.msra.mxu0 0.0
    %2007 = vmatprep.subr.mxu0 0.0
    %2008 = vmatpush2.msra.mxu0 0.0
    %2009 = vmatprep.subr.mxu0 0.0
    %2010 = vmatpush2.msra.mxu0 0.0
    %2011 = vmatprep.subr.mxu0 0.0
    %2012 = vmatpush2.msra.mxu0 0.0
    %2013 = vmatprep.subr.mxu0 0.0
    %2014 = vmatpush2.msra.mxu0 0.0
    %2015 = vmatprep.subr.mxu0 0.0
    %2016 = vmatpush2.msra.mxu0 0.0
    %2017 = vmatprep.mubr.f32.mxu0 0.0
    %2018 = vmatmul.mubr.f32.gmra.mxu0 %v1951
    %v2019 = vpop.f32.mrf.mxu0
    %v2020 = vadd.f32 0.0, %v2019
    %v2021 = vpop.f32.mrf.mxu0
    %2022 = vdwg.mxu0
    %v2023 = vadd.f32 %v1468, %v1947
    %v2024 = vadd.f32 %v1541, %v2020
    %2025 = vrot.lane.b32.xlu0 %v222, 104
    %v2026 = vpop.permute.xlu0 %2025
    %2027 = vrot.lane.b32.xlu0 %v368, 104
    %v2028 = vpop.permute.xlu0 %2027
    %v2029 = vsel %vm594, %v2026, 0
    %v2031 = vsel %vm594, %v2028, 0
    %2033 = vmatprep.subr.mxu0 0.0
    %2034 = vmatpush1.xpose.msra.mxu0 0.0
    %2035 = vmatprep.subr.mxu0 0.0
    %2036 = vmatpush1.xpose.msra.mxu0 0.0
    %2037 = vmatprep.subr.mxu0 0.0
    %2038 = vmatpush1.xpose.msra.mxu0 0.0
    %2039 = vmatprep.subr.mxu0 0.0
    %2040 = vmatpush1.xpose.msra.mxu0 0.0
    %2041 = vmatprep.subr.mxu0 0.0
    %2042 = vmatpush1.xpose.msra.mxu0 0.0
    %2043 = vmatprep.subr.mxu0 0.0
    %2044 = vmatpush1.xpose.msra.mxu0 0.0
    %2045 = vmatprep.subr.mxu0 0.0
    %2046 = vmatpush1.xpose.msra.mxu0 0.0
    %2047 = vmatprep.subr.mxu0 0.0
    %2048 = vmatpush1.xpose.msra.mxu0 0.0
    %2049 = vmatprep.subr.mxu0 0.0
    %2050 = vmatpush1.xpose.msra.mxu0 0.0
    %2051 = vmatprep.subr.mxu0 0.0
    %2052 = vmatpush1.xpose.msra.mxu0 0.0
    %2053 = vmatprep.subr.mxu0 0.0
    %2054 = vmatpush1.xpose.msra.mxu0 0.0
    %2055 = vmatprep.subr.mxu0 0.0
    %2056 = vmatpush1.xpose.msra.mxu0 0.0
    %2057 = vmatprep.subr.mxu0 0.0
    %2058 = vmatpush1.xpose.msra.mxu0 0.0
    %2059 = vmatprep.subr.mxu0 0.0
    %2060 = vmatpush1.xpose.msra.mxu0 0.0
    %2061 = vmatprep.subr.mxu0 0.0
    %2062 = vmatpush1.xpose.msra.mxu0 0.0
    %2063 = vmatprep.subr.mxu0 0.0
    %2064 = vmatpush1.xpose.msra.mxu0 %v2031
    %2065 = vmatprep.subr.mxu0 0.0
    %2066 = vmatpush2.xpose.msra.mxu0 0.0
    %2067 = vmatprep.subr.mxu0 0.0
    %2068 = vmatpush2.xpose.msra.mxu0 0.0
    %2069 = vmatprep.subr.mxu0 0.0
    %2070 = vmatpush2.xpose.msra.mxu0 0.0
    %2071 = vmatprep.subr.mxu0 0.0
    %2072 = vmatpush2.xpose.msra.mxu0 0.0
    %2073 = vmatprep.subr.mxu0 0.0
    %2074 = vmatpush2.xpose.msra.mxu0 0.0
    %2075 = vmatprep.subr.mxu0 0.0
    %2076 = vmatpush2.xpose.msra.mxu0 0.0
    %2077 = vmatprep.subr.mxu0 0.0
    %2078 = vmatpush2.xpose.msra.mxu0 0.0
    %2079 = vmatprep.subr.mxu0 0.0
    %2080 = vmatpush2.xpose.msra.mxu0 0.0
    %2081 = vmatprep.subr.mxu0 0.0
    %2082 = vmatpush2.xpose.msra.mxu0 0.0
    %2083 = vmatprep.subr.mxu0 0.0
    %2084 = vmatpush2.xpose.msra.mxu0 0.0
    %2085 = vmatprep.subr.mxu0 0.0
    %2086 = vmatpush2.xpose.msra.mxu0 0.0
    %2087 = vmatprep.subr.mxu0 0.0
    %2088 = vmatpush2.xpose.msra.mxu0 0.0
    %2089 = vmatprep.subr.mxu0 0.0
    %2090 = vmatpush2.xpose.msra.mxu0 0.0
    %2091 = vmatprep.subr.mxu0 0.0
    %2092 = vmatpush2.xpose.msra.mxu0 0.0
    %2093 = vmatprep.subr.mxu0 0.0
    %2094 = vmatpush2.xpose.msra.mxu0 0.0
    %2095 = vmatprep.subr.mxu0 0.0
    %2096 = vmatpush2.xpose.msra.mxu0 0.0
    %2097 = vmatprep.mubr.f32.mxu0 0.0
    %2098 = vmatmul.mubr.f32.gmra.mxu0 %v2029
    %v2099 = vpop.f32.mrf.mxu0
    %v2100 = vadd.f32 0.0, %v2099
    %v2101 = vpop.f32.mrf.mxu0
    %2102 = vdwg.mxu0
    %2103 = vrot.lane.b32.xlu0 %v295, 104
    %v2104 = vpop.permute.xlu0 %2103
    %2105 = vrot.lane.b32.xlu0 %v441, 104
    %v2106 = vpop.permute.xlu0 %2105
    %v2107 = vsel %vm594, %v2104, 0
    %v2109 = vsel %vm594, %v2106, 0
    %2111 = vmatprep.subr.mxu0 0.0
    %2112 = vmatpush1.xpose.msra.mxu0 0.0
    %2113 = vmatprep.subr.mxu0 0.0
    %2114 = vmatpush1.xpose.msra.mxu0 0.0
    %2115 = vmatprep.subr.mxu0 0.0
    %2116 = vmatpush1.xpose.msra.mxu0 0.0
    %2117 = vmatprep.subr.mxu0 0.0
    %2118 = vmatpush1.xpose.msra.mxu0 0.0
    %2119 = vmatprep.subr.mxu0 0.0
    %2120 = vmatpush1.xpose.msra.mxu0 0.0
    %2121 = vmatprep.subr.mxu0 0.0
    %2122 = vmatpush1.xpose.msra.mxu0 0.0
    %2123 = vmatprep.subr.mxu0 0.0
    %2124 = vmatpush1.xpose.msra.mxu0 0.0
    %2125 = vmatprep.subr.mxu0 0.0
    %2126 = vmatpush1.xpose.msra.mxu0 0.0
    %2127 = vmatprep.subr.mxu0 0.0
    %2128 = vmatpush1.xpose.msra.mxu0 0.0
    %2129 = vmatprep.subr.mxu0 0.0
    %2130 = vmatpush1.xpose.msra.mxu0 0.0
    %2131 = vmatprep.subr.mxu0 0.0
    %2132 = vmatpush1.xpose.msra.mxu0 0.0
    %2133 = vmatprep.subr.mxu0 0.0
    %2134 = vmatpush1.xpose.msra.mxu0 0.0
    %2135 = vmatprep.subr.mxu0 0.0
    %2136 = vmatpush1.xpose.msra.mxu0 0.0
    %2137 = vmatprep.subr.mxu0 0.0
    %2138 = vmatpush1.xpose.msra.mxu0 0.0
    %2139 = vmatprep.subr.mxu0 0.0
    %2140 = vmatpush1.xpose.msra.mxu0 0.0
    %2141 = vmatprep.subr.mxu0 0.0
    %2142 = vmatpush1.xpose.msra.mxu0 %v2109
    %2143 = vmatprep.subr.mxu0 0.0
    %2144 = vmatpush2.xpose.msra.mxu0 0.0
    %2145 = vmatprep.subr.mxu0 0.0
    %2146 = vmatpush2.xpose.msra.mxu0 0.0
    %2147 = vmatprep.subr.mxu0 0.0
    %2148 = vmatpush2.xpose.msra.mxu0 0.0
    %2149 = vmatprep.subr.mxu0 0.0
    %2150 = vmatpush2.xpose.msra.mxu0 0.0
    %2151 = vmatprep.subr.mxu0 0.0
    %2152 = vmatpush2.xpose.msra.mxu0 0.0
    %2153 = vmatprep.subr.mxu0 0.0
    %2154 = vmatpush2.xpose.msra.mxu0 0.0
    %2155 = vmatprep.subr.mxu0 0.0
    %2156 = vmatpush2.xpose.msra.mxu0 0.0
    %2157 = vmatprep.subr.mxu0 0.0
    %2158 = vmatpush2.xpose.msra.mxu0 0.0
    %2159 = vmatprep.subr.mxu0 0.0
    %2160 = vmatpush2.xpose.msra.mxu0 0.0
    %2161 = vmatprep.subr.mxu0 0.0
    %2162 = vmatpush2.xpose.msra.mxu0 0.0
    %2163 = vmatprep.subr.mxu0 0.0
    %2164 = vmatpush2.xpose.msra.mxu0 0.0
    %2165 = vmatprep.subr.mxu0 0.0
    %2166 = vmatpush2.xpose.msra.mxu0 0.0
    %2167 = vmatprep.subr.mxu0 0.0
    %2168 = vmatpush2.xpose.msra.mxu0 0.0
    %2169 = vmatprep.subr.mxu0 0.0
    %2170 = vmatpush2.xpose.msra.mxu0 0.0
    %2171 = vmatprep.subr.mxu0 0.0
    %2172 = vmatpush2.xpose.msra.mxu0 0.0
    %2173 = vmatprep.subr.mxu0 0.0
    %2174 = vmatpush2.xpose.msra.mxu0 0.0
    %2175 = vmatprep.mubr.f32.mxu0 0.0
    %2176 = vmatmul.mubr.f32.gmra.mxu0 %v2107
    %v2177 = vpop.f32.mrf.mxu0
    %v2178 = vadd.f32 0.0, %v2177
    %v2179 = vpop.f32.mrf.mxu0
    %2180 = vdwg.mxu0
    %v2181 = vsel %vm594, %v2100, -inf
    %2182 = vmax.xlane.f32.xlu0 %v2181
    %v2183 = vpop.xlane.xlu0 %2182
    %v2184 = vsel %vm594, %v2178, -inf
    %2185 = vmax.xlane.f32.xlu0 %v2184
    %v2186 = vpop.xlane.xlu0 %2185
    %v2187 = vsub.f32 %v2100, %v2183
    %v2188 = vsub.f32 %v2178, %v2186
    %v2189 = vmul.f32 %v2187, 1.442695
    %v2190 = vpow.pop %v2189
    %v2191 = vmul.f32 %v2188, 1.442695
    %v2192 = vpow.pop %v2191
    %v2193 = vsel %vm594, %v2190, 0.0
    %2194 = vadd.xlane.f32.xlu0 %v2193
    %v2195 = vpop.xlane.xlu0 %2194
    %v2196 = vsel %vm594, %v2192, 0.0
    %2197 = vadd.xlane.f32.xlu0 %v2196
    %v2198 = vpop.xlane.xlu0 %2197
    %v2199 = vrcp.pop %v2195
    %v2200 = vrcp.pop %v2198
    %v2201 = vmul.f32 %v2190, %v2199
    %v2202 = vmul.f32 %v2192, %v2200
    %s2203 = scalar_lea.vmem [#allocation11], 48
    %2204 = vst.msk [vmem:[%s2203] sm:$0xff] %vm594, %v2201
    %2205 = vst.msk [vmem:[%s2203 + $0x8] sm:$0xff] %vm594, %v2202
    %2206 = vrot.lane.b32.xlu0 %v514, 104
    %v2207 = vpop.permute.xlu0 %2206
    %v2210 = vsel %vm594, %v2201, 0
    %2212 = vmatprep.subr.mxu0 0.0
    %2213 = vmatpush1.msra.mxu0 0.0
    %2214 = vmatprep.subr.mxu0 0.0
    %2215 = vmatpush1.msra.mxu0 0.0
    %2216 = vmatprep.subr.mxu0 0.0
    %2217 = vmatpush1.msra.mxu0 0.0
    %2218 = vmatprep.subr.mxu0 0.0
    %2219 = vmatpush1.msra.mxu0 0.0
    %2220 = vmatprep.subr.mxu0 0.0
    %2221 = vmatpush1.msra.mxu0 0.0
    %2222 = vmatprep.subr.mxu0 0.0
    %2223 = vmatpush1.msra.mxu0 0.0
    %2224 = vmatprep.subr.mxu0 0.0
    %2225 = vmatpush1.msra.mxu0 0.0
    %2226 = vmatprep.subr.mxu0 0.0
    %2227 = vmatpush1.msra.mxu0 0.0
    %2228 = vmatprep.subr.mxu0 0.0
    %2229 = vmatpush1.msra.mxu0 0.0
    %2230 = vmatprep.subr.mxu0 0.0
    %2231 = vmatpush1.msra.mxu0 0.0
    %2232 = vmatprep.subr.mxu0 0.0
    %2233 = vmatpush1.msra.mxu0 0.0
    %2234 = vmatprep.subr.mxu0 0.0
    %2235 = vmatpush1.msra.mxu0 0.0
    %2236 = vmatprep.subr.mxu0 0.0
    %2237 = vmatpush1.msra.mxu0 0.0
    %2238 = vmatprep.subr.mxu0 0.0
    %2239 = vmatpush1.msra.mxu0 0.0
    %2240 = vmatprep.subr.mxu0 0.0
    %2241 = vmatpush1.msra.mxu0 0.0
    %2242 = vmatprep.subr.mxu0 0.0
    %2243 = vmatpush1.msra.mxu0 %v2207
    %2244 = vmatprep.subr.mxu0 0.0
    %2245 = vmatpush2.msra.mxu0 0.0
    %2246 = vmatprep.subr.mxu0 0.0
    %2247 = vmatpush2.msra.mxu0 0.0
    %2248 = vmatprep.subr.mxu0 0.0
    %2249 = vmatpush2.msra.mxu0 0.0
    %2250 = vmatprep.subr.mxu0 0.0
    %2251 = vmatpush2.msra.mxu0 0.0
    %2252 = vmatprep.subr.mxu0 0.0
    %2253 = vmatpush2.msra.mxu0 0.0
    %2254 = vmatprep.subr.mxu0 0.0
    %2255 = vmatpush2.msra.mxu0 0.0
    %2256 = vmatprep.subr.mxu0 0.0
    %2257 = vmatpush2.msra.mxu0 0.0
    %2258 = vmatprep.subr.mxu0 0.0
    %2259 = vmatpush2.msra.mxu0 0.0
    %2260 = vmatprep.subr.mxu0 0.0
    %2261 = vmatpush2.msra.mxu0 0.0
    %2262 = vmatprep.subr.mxu0 0.0
    %2263 = vmatpush2.msra.mxu0 0.0
    %2264 = vmatprep.subr.mxu0 0.0
    %2265 = vmatpush2.msra.mxu0 0.0
    %2266 = vmatprep.subr.mxu0 0.0
    %2267 = vmatpush2.msra.mxu0 0.0
    %2268 = vmatprep.subr.mxu0 0.0
    %2269 = vmatpush2.msra.mxu0 0.0
    %2270 = vmatprep.subr.mxu0 0.0
    %2271 = vmatpush2.msra.mxu0 0.0
    %2272 = vmatprep.subr.mxu0 0.0
    %2273 = vmatpush2.msra.mxu0 0.0
    %2274 = vmatprep.subr.mxu0 0.0
    %2275 = vmatpush2.msra.mxu0 0.0
    %2276 = vmatprep.mubr.f32.mxu0 0.0
    %2277 = vmatmul.mubr.f32.gmra.mxu0 %v2210
    %v2278 = vpop.f32.mrf.mxu0
    %v2279 = vadd.f32 0.0, %v2278
    %v2280 = vpop.f32.mrf.mxu0
    %2281 = vdwg.mxu0
    %2282 = vrot.lane.b32.xlu0 %v587, 104
    %v2283 = vpop.permute.xlu0 %2282
    %v2286 = vsel %vm594, %v2202, 0
    %2288 = vmatprep.subr.mxu0 0.0
    %2289 = vmatpush1.msra.mxu0 0.0
    %2290 = vmatprep.subr.mxu0 0.0
    %2291 = vmatpush1.msra.mxu0 0.0
    %2292 = vmatprep.subr.mxu0 0.0
    %2293 = vmatpush1.msra.mxu0 0.0
    %2294 = vmatprep.subr.mxu0 0.0
    %2295 = vmatpush1.msra.mxu0 0.0
    %2296 = vmatprep.subr.mxu0 0.0
    %2297 = vmatpush1.msra.mxu0 0.0
    %2298 = vmatprep.subr.mxu0 0.0
    %2299 = vmatpush1.msra.mxu0 0.0
    %2300 = vmatprep.subr.mxu0 0.0
    %2301 = vmatpush1.msra.mxu0 0.0
    %2302 = vmatprep.subr.mxu0 0.0
    %2303 = vmatpush1.msra.mxu0 0.0
    %2304 = vmatprep.subr.mxu0 0.0
    %2305 = vmatpush1.msra.mxu0 0.0
    %2306 = vmatprep.subr.mxu0 0.0
    %2307 = vmatpush1.msra.mxu0 0.0
    %2308 = vmatprep.subr.mxu0 0.0
    %2309 = vmatpush1.msra.mxu0 0.0
    %2310 = vmatprep.subr.mxu0 0.0
    %2311 = vmatpush1.msra.mxu0 0.0
    %2312 = vmatprep.subr.mxu0 0.0
    %2313 = vmatpush1.msra.mxu0 0.0
    %2314 = vmatprep.subr.mxu0 0.0
    %2315 = vmatpush1.msra.mxu0 0.0
    %2316 = vmatprep.subr.mxu0 0.0
    %2317 = vmatpush1.msra.mxu0 0.0
    %2318 = vmatprep.subr.mxu0 0.0
    %2319 = vmatpush1.msra.mxu0 %v2283
    %2320 = vmatprep.subr.mxu0 0.0
    %2321 = vmatpush2.msra.mxu0 0.0
    %2322 = vmatprep.subr.mxu0 0.0
    %2323 = vmatpush2.msra.mxu0 0.0
    %2324 = vmatprep.subr.mxu0 0.0
    %2325 = vmatpush2.msra.mxu0 0.0
    %2326 = vmatprep.subr.mxu0 0.0
    %2327 = vmatpush2.msra.mxu0 0.0
    %2328 = vmatprep.subr.mxu0 0.0
    %2329 = vmatpush2.msra.mxu0 0.0
    %2330 = vmatprep.subr.mxu0 0.0
    %2331 = vmatpush2.msra.mxu0 0.0
    %2332 = vmatprep.subr.mxu0 0.0
    %2333 = vmatpush2.msra.mxu0 0.0
    %2334 = vmatprep.subr.mxu0 0.0
    %2335 = vmatpush2.msra.mxu0 0.0
    %2336 = vmatprep.subr.mxu0 0.0
    %2337 = vmatpush2.msra.mxu0 0.0
    %2338 = vmatprep.subr.mxu0 0.0
    %2339 = vmatpush2.msra.mxu0 0.0
    %2340 = vmatprep.subr.mxu0 0.0
    %2341 = vmatpush2.msra.mxu0 0.0
    %2342 = vmatprep.subr.mxu0 0.0
    %2343 = vmatpush2.msra.mxu0 0.0
    %2344 = vmatprep.subr.mxu0 0.0
    %2345 = vmatpush2.msra.mxu0 0.0
    %2346 = vmatprep.subr.mxu0 0.0
    %2347 = vmatpush2.msra.mxu0 0.0
    %2348 = vmatprep.subr.mxu0 0.0
    %2349 = vmatpush2.msra.mxu0 0.0
    %2350 = vmatprep.subr.mxu0 0.0
    %2351 = vmatpush2.msra.mxu0 0.0
    %2352 = vmatprep.mubr.f32.mxu0 0.0
    %2353 = vmatmul.mubr.f32.gmra.mxu0 %v2286
    %v2354 = vpop.f32.mrf.mxu0
    %v2355 = vadd.f32 0.0, %v2354
    %v2356 = vpop.f32.mrf.mxu0
    %2357 = vdwg.mxu0
    %v2359 = vsel %vm594, %v2279, 0
    %2361 = vmatprep.subr.mxu0 0.0
    %2362 = vmatpush1.msra.mxu0 0.0
    %2363 = vmatprep.subr.mxu0 0.0
    %2364 = vmatpush1.msra.mxu0 0.0
    %2365 = vmatprep.subr.mxu0 0.0
    %2366 = vmatpush1.msra.mxu0 0.0
    %2367 = vmatprep.subr.mxu0 0.0
    %2368 = vmatpush1.msra.mxu0 0.0
    %2369 = vmatprep.subr.mxu0 0.0
    %2370 = vmatpush1.msra.mxu0 0.0
    %2371 = vmatprep.subr.mxu0 0.0
    %2372 = vmatpush1.msra.mxu0 0.0
    %2373 = vmatprep.subr.mxu0 0.0
    %2374 = vmatpush1.msra.mxu0 0.0
    %2375 = vmatprep.subr.mxu0 0.0
    %2376 = vmatpush1.msra.mxu0 0.0
    %2377 = vmatprep.subr.mxu0 0.0
    %2378 = vmatpush1.msra.mxu0 0.0
    %2379 = vmatprep.subr.mxu0 0.0
    %2380 = vmatpush1.msra.mxu0 0.0
    %2381 = vmatprep.subr.mxu0 0.0
    %2382 = vmatpush1.msra.mxu0 0.0
    %2383 = vmatprep.subr.mxu0 0.0
    %2384 = vmatpush1.msra.mxu0 0.0
    %2385 = vmatprep.subr.mxu0 0.0
    %2386 = vmatpush1.msra.mxu0 0.0
    %2387 = vmatprep.subr.mxu0 0.0
    %2388 = vmatpush1.msra.mxu0 0.0
    %2389 = vmatprep.subr.mxu0 0.0
    %2390 = vmatpush1.msra.mxu0 0.0
    %2391 = vmatprep.subr.mxu0 0.0
    %2392 = vmatpush1.msra.mxu0 %v593
    %2393 = vmatprep.subr.mxu0 0.0
    %2394 = vmatpush2.msra.mxu0 0.0
    %2395 = vmatprep.subr.mxu0 0.0
    %2396 = vmatpush2.msra.mxu0 0.0
    %2397 = vmatprep.subr.mxu0 0.0
    %2398 = vmatpush2.msra.mxu0 0.0
    %2399 = vmatprep.subr.mxu0 0.0
    %2400 = vmatpush2.msra.mxu0 0.0
    %2401 = vmatprep.subr.mxu0 0.0
    %2402 = vmatpush2.msra.mxu0 0.0
    %2403 = vmatprep.subr.mxu0 0.0
    %2404 = vmatpush2.msra.mxu0 0.0
    %2405 = vmatprep.subr.mxu0 0.0
    %2406 = vmatpush2.msra.mxu0 0.0
    %2407 = vmatprep.subr.mxu0 0.0
    %2408 = vmatpush2.msra.mxu0 0.0
    %2409 = vmatprep.subr.mxu0 0.0
    %2410 = vmatpush2.msra.mxu0 0.0
    %2411 = vmatprep.subr.mxu0 0.0
    %2412 = vmatpush2.msra.mxu0 0.0
    %2413 = vmatprep.subr.mxu0 0.0
    %2414 = vmatpush2.msra.mxu0 0.0
    %2415 = vmatprep.subr.mxu0 0.0
    %2416 = vmatpush2.msra.mxu0 0.0
    %2417 = vmatprep.subr.mxu0 0.0
    %2418 = vmatpush2.msra.mxu0 0.0
    %2419 = vmatprep.subr.mxu0 0.0
    %2420 = vmatpush2.msra.mxu0 0.0
    %2421 = vmatprep.subr.mxu0 0.0
    %2422 = vmatpush2.msra.mxu0 0.0
    %2423 = vmatprep.subr.mxu0 0.0
    %2424 = vmatpush2.msra.mxu0 0.0
    %2425 = vmatprep.mubr.f32.mxu0 0.0
    %2426 = vmatmul.mubr.f32.gmra.mxu0 %v2359
    %v2427 = vpop.f32.mrf.mxu0
    %v2428 = vadd.f32 0.0, %v2427
    %v2429 = vpop.f32.mrf.mxu0
    %2430 = vdwg.mxu0
    %v2432 = vsel %vm594, %v2355, 0
    %2434 = vmatprep.subr.mxu0 0.0
    %2435 = vmatpush1.msra.mxu0 0.0
    %2436 = vmatprep.subr.mxu0 0.0
    %2437 = vmatpush1.msra.mxu0 0.0
    %2438 = vmatprep.subr.mxu0 0.0
    %2439 = vmatpush1.msra.mxu0 0.0
    %2440 = vmatprep.subr.mxu0 0.0
    %2441 = vmatpush1.msra.mxu0 0.0
    %2442 = vmatprep.subr.mxu0 0.0
    %2443 = vmatpush1.msra.mxu0 0.0
    %2444 = vmatprep.subr.mxu0 0.0
    %2445 = vmatpush1.msra.mxu0 0.0
    %2446 = vmatprep.subr.mxu0 0.0
    %2447 = vmatpush1.msra.mxu0 0.0
    %2448 = vmatprep.subr.mxu0 0.0
    %2449 = vmatpush1.msra.mxu0 0.0
    %2450 = vmatprep.subr.mxu0 0.0
    %2451 = vmatpush1.msra.mxu0 0.0
    %2452 = vmatprep.subr.mxu0 0.0
    %2453 = vmatpush1.msra.mxu0 0.0
    %2454 = vmatprep.subr.mxu0 0.0
    %2455 = vmatpush1.msra.mxu0 0.0
    %2456 = vmatprep.subr.mxu0 0.0
    %2457 = vmatpush1.msra.mxu0 0.0
    %2458 = vmatprep.subr.mxu0 0.0
    %2459 = vmatpush1.msra.mxu0 0.0
    %2460 = vmatprep.subr.mxu0 0.0
    %2461 = vmatpush1.msra.mxu0 0.0
    %2462 = vmatprep.subr.mxu0 0.0
    %2463 = vmatpush1.msra.mxu0 0.0
    %2464 = vmatprep.subr.mxu0 0.0
    %2465 = vmatpush1.msra.mxu0 %v593
    %2466 = vmatprep.subr.mxu0 0.0
    %2467 = vmatpush2.msra.mxu0 0.0
    %2468 = vmatprep.subr.mxu0 0.0
    %2469 = vmatpush2.msra.mxu0 0.0
    %2470 = vmatprep.subr.mxu0 0.0
    %2471 = vmatpush2.msra.mxu0 0.0
    %2472 = vmatprep.subr.mxu0 0.0
    %2473 = vmatpush2.msra.mxu0 0.0
    %2474 = vmatprep.subr.mxu0 0.0
    %2475 = vmatpush2.msra.mxu0 0.0
    %2476 = vmatprep.subr.mxu0 0.0
    %2477 = vmatpush2.msra.mxu0 0.0
    %2478 = vmatprep.subr.mxu0 0.0
    %2479 = vmatpush2.msra.mxu0 0.0
    %2480 = vmatprep.subr.mxu0 0.0
    %2481 = vmatpush2.msra.mxu0 0.0
    %2482 = vmatprep.subr.mxu0 0.0
    %2483 = vmatpush2.msra.mxu0 0.0
    %2484 = vmatprep.subr.mxu0 0.0
    %2485 = vmatpush2.msra.mxu0 0.0
    %2486 = vmatprep.subr.mxu0 0.0
    %2487 = vmatpush2.msra.mxu0 0.0
    %2488 = vmatprep.subr.mxu0 0.0
    %2489 = vmatpush2.msra.mxu0 0.0
    %2490 = vmatprep.subr.mxu0 0.0
    %2491 = vmatpush2.msra.mxu0 0.0
    %2492 = vmatprep.subr.mxu0 0.0
    %2493 = vmatpush2.msra.mxu0 0.0
    %2494 = vmatprep.subr.mxu0 0.0
    %2495 = vmatpush2.msra.mxu0 0.0
    %2496 = vmatprep.subr.mxu0 0.0
    %2497 = vmatpush2.msra.mxu0 0.0
    %2498 = vmatprep.mubr.f32.mxu0 0.0
    %2499 = vmatmul.mubr.f32.gmra.mxu0 %v2432
    %v2500 = vpop.f32.mrf.mxu0
    %v2501 = vadd.f32 0.0, %v2500
    %v2502 = vpop.f32.mrf.mxu0
    %2503 = vdwg.mxu0
    %v2504 = vadd.f32 %v2023, %v2428
    %v2505 = vadd.f32 %v2024, %v2501
    %v2506 = vld [vmem:[%s4] sm:$0x1]
    %v2508 = vlaneseq
    %v2509 = vshrl.u32 %v2508, 7
    %v2510 = vsub.s32 0, %v2509
    %v2511 = vrot.slane %v2506, %v2510
    %v2513 = vadd.f32 %v2504, %v2511
    %v2514 = vadd.f32 %v2505, %v2511
    %2515 = vst.msk [vmem:[#allocation10] sm:$0xff] %vm151, %v2513
    %2516 = vst.msk [vmem:[#allocation10 + $0x8] sm:$0xff] %vm151, %v2514
    // Predicated region
    $region38: #{tpu_custom_call.1} parent=1 // pred_check
      _
    $region39: #{tpu_custom_call.1} parent=1 // pred_check_branch
      %2518 = sbr.rel (0) target = $region41
    $region40: #{tpu_custom_call.1} parent=1 // pred_region
      %s2520 = ssub.s32 256, 256
      %2521 = vsyncadd [#allocation4], %s2520
      %s2522 = sshll.u32 [#allocation10], 4
      %s2523 = int_to_ptr.vmem [resolvable:$true] %s2522
      %2528 = dma.vmem_to_hbm [thread:$0]  %s2523, 256, %s5, [#allocation4], 128, 128, 8
    $region41: #{tpu_custom_call.1} parent=1 // pred_fallthru
      _
    // Predicated region
    $region42: #{tpu_custom_call.1} parent=1 // pred_check
      _
    $region43: #{tpu_custom_call.1} parent=1 // pred_check_branch
      %2530 = sbr.rel (0) target = $region45
    $region44: #{tpu_custom_call.1} parent=1 // pred_region
      %s2532 = ssub.s32 1024, 1024
      %2533 = vsyncadd [#allocation12], %s2532
      %s2534 = sshll.u32 [#allocation11], 4
      %s2535 = int_to_ptr.vmem [resolvable:$true] %s2534
      %2540 = dma.vmem_to_hbm [thread:$0]  %s2535, 1024, %s6, [#allocation12], 128, 128, 8
    $region45: #{tpu_custom_call.1} parent=1 // pred_fallthru
      _
    // Predicated region
    $region46: #{tpu_custom_call.1} parent=1 // pred_check
      _
    $region47: #{tpu_custom_call.1} parent=1 // pred_check_branch
      %2542 = sbr.rel (0) target = $region49
    $region48: #{tpu_custom_call.1} parent=1 // pred_region
      %2543 = dma.done [#allocation4], 256
    $region49: #{tpu_custom_call.1} parent=1 // pred_fallthru
      _
    // Predicated region
    $region50: #{tpu_custom_call.1} parent=1 // pred_check
      _
    $region51: #{tpu_custom_call.1} parent=1 // pred_check_branch
      %2545 = sbr.rel (0) target = $region53
    $region52: #{tpu_custom_call.1} parent=1 // pred_region
      %2546 = dma.done [#allocation12], 1024
    $region53: #{tpu_custom_call.1} parent=1 // pred_fallthru
      _
    %2547 = vsyncpa [#allocation3], 1
    %2548 = vsyncpa [#allocation6], 1
    %2549 = vsyncpa [#allocation9], 1
    %2550 = vsyncpa [#allocation4], 1
    %2551 = vsyncpa [#allocation12], 1

</llo_original>
